<compile_context>
chip_gen: v7x
topology: tpu7x:2x2x1
jax: 0.10.0
libtpu: 0.0.40
codegen_flags: <defaults>
</compile_context>

<pallas_src>
import functools

import jax
import jax.numpy as jnp
from jax import lax
from jax.experimental import pallas as pl
from jax.experimental.pallas import tpu as pltpu


def _time_cond_attention_kernel(
    x_ref,      # (1, n, dim)
    t_ref,      # (1, 1, time_dim)
    gamma_ref,  # (1, dim)
    beta_ref,   # (1, dim)
    wts_ref,    # (time_dim, dim)   time-cond Linear, "scale" half
    bts_ref,    # (1, dim)
    wtsh_ref,   # (time_dim, dim)   time-cond Linear, "shift" half
    btsh_ref,   # (1, dim)
    wqkv_ref,   # (dim, 3*hidden)   fused [Wq | Wk | Wv]
    wo_ref,     # (hidden, dim)
    o_ref,      # (1, n, dim)
    *,
    heads: int,
    dim_head: int,
    attn_scale: float,
    eps: float,
):
    hidden = heads * dim_head

    # ---- LayerNorm (f32 compute, single cast at the final store) ----
    x = x_ref[0].astype(jnp.float32)                      # (n, dim)
    gamma = gamma_ref[...].astype(jnp.float32)            # (1, dim)
    beta = beta_ref[...].astype(jnp.float32)              # (1, dim)
    mean = jnp.mean(x, axis=-1, keepdims=True)
    var = jnp.mean(jnp.square(x - mean), axis=-1, keepdims=True)
    xn = (x - mean) * lax.rsqrt(var + eps) * gamma + beta

    # ---- Time conditioning: SiLU -> Linear -> x * (scale + 1) + shift ----
    t = t_ref[0].astype(jnp.float32)                      # (1, time_dim)
    t = t * jax.nn.sigmoid(t)                             # SiLU
    t_scale = jnp.dot(t, wts_ref[...], preferred_element_type=jnp.float32) + bts_ref[...]
    t_shift = jnp.dot(t, wtsh_ref[...], preferred_element_type=jnp.float32) + btsh_ref[...]
    xn = xn * (t_scale + 1.0) + t_shift                   # (n, dim)

    # ---- Fused QKV projection: one wide MXU pass instead of 3*heads narrow ones ----
    qkv = jnp.dot(xn, wqkv_ref[...], preferred_element_type=jnp.float32)  # (n, 3*hidden)
    q = qkv[:, :hidden] * attn_scale
    k = qkv[:, hidden:2 * hidden]
    v = qkv[:, 2 * hidden:]

    # ---- Per-head softmax attention (static unroll over heads) ----
    outs = []
    for h in range(heads):
        sl = slice(h * dim_head, (h + 1) * dim_head)
        qh, kh, vh = q[:, sl], k[:, sl], v[:, sl]          # (n, dim_head) each
        sim = lax.dot_general(qh, kh, (((1,), (1,)), ((), ())),
                              preferred_element_type=jnp.float32)   # (n, n)
        sim = sim - jnp.max(sim, axis=-1, keepdims=True)
        p = jnp.exp(sim)
        attn = p / jnp.sum(p, axis=-1, keepdims=True)
        outs.append(jnp.dot(attn, vh, preferred_element_type=jnp.float32))  # (n, dim_head)

    # 'b h n d -> b n (h d)' then a single full-contraction output projection.
    out_all = jnp.concatenate(outs, axis=-1)               # (n, hidden)
    o_ref[0] = jnp.dot(out_all, wo_ref[...],
                       preferred_element_type=jnp.float32).astype(o_ref.dtype)


def time_cond_attention(x, time, params, *, heads, dim_head):
    """x: (b, n, dim) f32, time: (b, time_cond_dim) f32. Returns (b, n, dim)."""
    b, n, dim = x.shape
    hidden = heads * dim_head
    tdim = time.shape[-1]

    gamma = params["gamma"].reshape(1, dim)
    beta = params["beta"].reshape(1, dim)

    # time-cond Linear split into (scale, shift) halves -> no lane slicing in-kernel.
    wt, bt = params["w_time"], params["b_time"]           # (tdim, 2*dim), (2*dim,)
    wts, wtsh = wt[:, :dim], wt[:, dim:]
    bts, btsh = bt[:dim].reshape(1, dim), bt[dim:].reshape(1, dim)

    # Fused QKV weight [Wq | Wk | Wv]; w_kv already stores K then V contiguously.
    wqkv = jnp.concatenate([params["w_q"], params["w_kv"]], axis=-1)  # (dim, 3*hidden)
    wo = params["w_out"]                                              # (hidden, dim)

    time3 = time.reshape(b, 1, tdim)

    kernel = functools.partial(
        _time_cond_attention_kernel,
        heads=heads, dim_head=dim_head, attn_scale=dim_head ** -0.5, eps=1e-5)

    const2 = lambda a: pl.BlockSpec(a.shape, lambda i: (0, 0))

    itemsize = x.dtype.itemsize
    flops = b * (2 * n * dim * 3 * hidden            # fused QKV
                 + 4 * heads * n * n * dim_head      # sim + attn@v
                 + 2 * n * hidden * dim              # out projection
                 + 2 * tdim * 2 * dim)               # time-cond linear
    transcendentals = b * (heads * n * n + tdim)
    bytes_accessed = itemsize * (x.size + time.size + 2 * dim + wt.size + bt.size
                                 + wqkv.size + wo.size + b * n * dim)

    out = pl.pallas_call(
        kernel,
        out_shape=jax.ShapeDtypeStruct((b, n, dim), x.dtype),
        grid=(b,),
        in_specs=[
            pl.BlockSpec((1, n, dim), lambda i: (i, 0, 0)),    # x
            pl.BlockSpec((1, 1, tdim), lambda i: (i, 0, 0)),   # time
            const2(gamma), const2(beta),
            const2(wts), const2(bts), const2(wtsh), const2(btsh),
            const2(wqkv), const2(wo),
        ],
        out_specs=pl.BlockSpec((1, n, dim), lambda i: (i, 0, 0)),
        compiler_params=pltpu.CompilerParams(
            dimension_semantics=("parallel",)),
        cost_estimate=pl.CostEstimate(
            flops=flops, transcendentals=transcendentals,
            bytes_accessed=bytes_accessed),
    )(x, time3, gamma, beta, wts, bts, wtsh, btsh, wqkv, wo)
    return out


def _reference(x, time, params, *, heads, dim_head, eps=1e-5):
    b, n, dim = x.shape
    hidden = heads * dim_head
    hi = jax.lax.Precision.HIGHEST

    mean = jnp.mean(x, axis=-1, keepdims=True)
    var = jnp.mean((x - mean) ** 2, axis=-1, keepdims=True)
    xn = (x - mean) / jnp.sqrt(var + eps) * params["gamma"] + params["beta"]

    t = jax.nn.silu(time)
    ss = jnp.dot(t, params["w_time"], precision=hi) + params["b_time"]
    scale, shift = ss[:, :dim], ss[:, dim:]
    xn = xn * (scale[:, None, :] + 1.0) + shift[:, None, :]

    q = jnp.einsum("bnd,de->bne", xn, params["w_q"], precision=hi)
    kv = jnp.einsum("bnd,de->bne", xn, params["w_kv"], precision=hi)
    k, v = kv[..., :hidden], kv[..., hidden:]

    def split_heads(z):
        return jnp.transpose(z.reshape(b, n, heads, dim_head), (0, 2, 1, 3))

    q, k, v = map(split_heads, (q, k, v))
    q = q * dim_head ** -0.5
    sim = jnp.einsum("bhid,bhjd->bhij", q, k, precision=hi)
    attn = jax.nn.softmax(sim, axis=-1)
    out = jnp.einsum("bhij,bhjd->bhid", attn, v, precision=hi)
    out = jnp.transpose(out, (0, 2, 1, 3)).reshape(b, n, hidden)
    return jnp.einsum("bnh,hd->bnd", out, params["w_out"], precision=hi)


if __name__ == "__main__":
    key = jax.random.PRNGKey(0)
    B, N, DIM = 2, 8, 32
    HEADS, DIM_HEAD = 4, 32
    HIDDEN = HEADS * DIM_HEAD
    TIME_DIM = 16

    keys = jax.random.split(key, 7)
    x = jax.random.normal(keys[0], (B, N, DIM), dtype=jnp.float32)
    time = jax.random.normal(keys[1], (B, TIME_DIM), dtype=jnp.float32)

    # NOTE: the PyTorch module zero-inits the time-cond Linear and to_out
    # (output would be identically zero); random weights here exercise the
    # full datapath while keeping the same forward-pass semantics.
    params = {
        "gamma": jnp.ones((DIM,), jnp.float32),
        "beta": jnp.zeros((DIM,), jnp.float32),
        "w_time": 0.1 * jax.random.normal(keys[2], (TIME_DIM, 2 * DIM), jnp.float32),
        "b_time": 0.1 * jax.random.normal(keys[3], (2 * DIM,), jnp.float32),
        "w_q": 0.1 * jax.random.normal(keys[4], (DIM, HIDDEN), jnp.float32),
        "w_kv": 0.1 * jax.random.normal(keys[5], (DIM, 2 * HIDDEN), jnp.float32),
        "w_out": 0.1 * jax.random.normal(keys[6], (HIDDEN, DIM), jnp.float32),
    }

    out = time_cond_attention(x, time, params, heads=HEADS, dim_head=DIM_HEAD)
    out = jax.block_until_ready(out)

    ref = _reference(x, time, params, heads=HEADS, dim_head=DIM_HEAD)
    assert out.shape == (B, N, DIM), out.shape
    err = float(jnp.max(jnp.abs(out - ref)))
    assert jnp.allclose(out, ref, atol=1e-4, rtol=1e-4), f"mismatch vs reference (max err {err})"

    print("KERNEL_OK")
</pallas_src>

<mosaic_0001>
module attributes {stable_mosaic.version = 11 : i64} {
  func.func @_time_cond_attention_kernel(%arg0: i32, %arg1: memref<1x8x32xf32, #tpu.memory_space<vmem>>, %arg2: memref<1x1x16xf32, #tpu.memory_space<vmem>>, %arg3: memref<1x32xf32, #tpu.memory_space<vmem>>, %arg4: memref<1x32xf32, #tpu.memory_space<vmem>>, %arg5: memref<16x32xf32, #tpu.memory_space<vmem>>, %arg6: memref<1x32xf32, #tpu.memory_space<vmem>>, %arg7: memref<16x32xf32, #tpu.memory_space<vmem>>, %arg8: memref<1x32xf32, #tpu.memory_space<vmem>>, %arg9: memref<32x384xf32, #tpu.memory_space<vmem>>, %arg10: memref<128x32xf32, #tpu.memory_space<vmem>>, %arg11: memref<1x8x32xf32, #tpu.memory_space<vmem>>) attributes {dimension_semantics = [#tpu.dimension_semantics<parallel>], iteration_bounds = array<i64: 2>, scalar_prefetch = 0 : i64, scratch_operands = 0 : i64, tpu.core_type = #tpu.core_type<tc>, window_params = [{transform_indices = @transform_0, window_bounds = array<i64: 1, 8, 32>}, {transform_indices = @transform_1, window_bounds = array<i64: 1, 1, 16>}, {pipeline_mode = #tpu.pipeline_mode<synchronous>, transform_indices = @transform_2, window_bounds = array<i64: 1, 32>}, {pipeline_mode = #tpu.pipeline_mode<synchronous>, transform_indices = @transform_3, window_bounds = array<i64: 1, 32>}, {pipeline_mode = #tpu.pipeline_mode<synchronous>, transform_indices = @transform_4, window_bounds = array<i64: 16, 32>}, {pipeline_mode = #tpu.pipeline_mode<synchronous>, transform_indices = @transform_5, window_bounds = array<i64: 1, 32>}, {pipeline_mode = #tpu.pipeline_mode<synchronous>, transform_indices = @transform_6, window_bounds = array<i64: 16, 32>}, {pipeline_mode = #tpu.pipeline_mode<synchronous>, transform_indices = @transform_7, window_bounds = array<i64: 1, 32>}, {pipeline_mode = #tpu.pipeline_mode<synchronous>, transform_indices = @transform_8, window_bounds = array<i64: 32, 384>}, {pipeline_mode = #tpu.pipeline_mode<synchronous>, transform_indices = @transform_9, window_bounds = array<i64: 128, 32>}, {transform_indices = @transform_10, window_bounds = array<i64: 1, 8, 32>}]} {
    %c0 = arith.constant 0 : index
    %c0_0 = arith.constant 0 : index
    %c0_1 = arith.constant 0 : index
    %0 = vector.load %arg1[%c0, %c0_0, %c0_1] : memref<1x8x32xf32, #tpu.memory_space<vmem>>, vector<1x8x32xf32>
    %1 = vector.shape_cast %0 : vector<1x8x32xf32> to vector<8x32xf32>
    %c0_2 = arith.constant 0 : index
    %c0_3 = arith.constant 0 : index
    %2 = vector.load %arg3[%c0_2, %c0_3] : memref<1x32xf32, #tpu.memory_space<vmem>>, vector<1x32xf32>
    %c0_4 = arith.constant 0 : index
    %c0_5 = arith.constant 0 : index
    %3 = vector.load %arg4[%c0_4, %c0_5] : memref<1x32xf32, #tpu.memory_space<vmem>>, vector<1x32xf32>
    %cst = arith.constant dense<0.000000e+00> : vector<8xf32>
    %4 = vector.multi_reduction <add>, %1, %cst [1] : vector<8x32xf32> to vector<8xf32>
    %5 = vector.shape_cast %4 : vector<8xf32> to vector<8x1xf32>
    %cst_6 = arith.constant 3.200000e+01 : f32
    %6 = vector.broadcast %cst_6 : f32 to vector<8x1xf32>
    %7 = arith.divf %5, %6 : vector<8x1xf32>
    %8 = vector.broadcast %7 : vector<8x1xf32> to vector<8x32xf32>
    %9 = arith.subf %1, %8 : vector<8x32xf32>
    %10 = arith.mulf %9, %9 : vector<8x32xf32>
    %cst_7 = arith.constant dense<0.000000e+00> : vector<8xf32>
    %11 = vector.multi_reduction <add>, %10, %cst_7 [1] : vector<8x32xf32> to vector<8xf32>
    %12 = vector.shape_cast %11 : vector<8xf32> to vector<8x1xf32>
    %cst_8 = arith.constant 3.200000e+01 : f32
    %13 = vector.broadcast %cst_8 : f32 to vector<8x1xf32>
    %14 = arith.divf %12, %13 : vector<8x1xf32>
    %15 = vector.broadcast %7 : vector<8x1xf32> to vector<8x32xf32>
    %16 = arith.subf %1, %15 : vector<8x32xf32>
    %cst_9 = arith.constant 9.99999974E-6 : f32
    %17 = vector.broadcast %cst_9 : f32 to vector<8x1xf32>
    %18 = arith.addf %14, %17 : vector<8x1xf32>
    %19 = math.rsqrt %18 : vector<8x1xf32>
    %20 = vector.broadcast %19 : vector<8x1xf32> to vector<8x32xf32>
    %21 = arith.mulf %16, %20 : vector<8x32xf32>
    %22 = vector.broadcast %2 : vector<1x32xf32> to vector<8x32xf32>
    %23 = arith.mulf %21, %22 : vector<8x32xf32>
    %24 = vector.broadcast %3 : vector<1x32xf32> to vector<8x32xf32>
    %25 = arith.addf %23, %24 : vector<8x32xf32>
    %c0_10 = arith.constant 0 : index
    %c0_11 = arith.constant 0 : index
    %c0_12 = arith.constant 0 : index
    %26 = vector.load %arg2[%c0_10, %c0_11, %c0_12] : memref<1x1x16xf32, #tpu.memory_space<vmem>>, vector<1x1x16xf32>
    %27 = vector.shape_cast %26 : vector<1x1x16xf32> to vector<1x16xf32>
    %28 = arith.negf %27 : vector<1x16xf32>
    %29 = math.exp %28 : vector<1x16xf32>
    %cst_13 = arith.constant 1.000000e+00 : f32
    %30 = vector.broadcast %cst_13 : f32 to vector<1x16xf32>
    %31 = arith.addf %30, %29 : vector<1x16xf32>
    %32 = arith.divf %30, %31 : vector<1x16xf32>
    %33 = arith.mulf %27, %32 : vector<1x16xf32>
    %c0_14 = arith.constant 0 : index
    %c0_15 = arith.constant 0 : index
    %34 = vector.load %arg5[%c0_14, %c0_15] : memref<16x32xf32, #tpu.memory_space<vmem>>, vector<16x32xf32>
    %cst_16 = arith.constant dense<0.000000e+00> : vector<1x32xf32>
    %35 = tpu.matmul %33, %34, %cst_16 {dimension_numbers = #tpu.dot_dimension_numbers<[1], [0], [0], [1], [0, 0, 1, 1], [], []>} : vector<1x16xf32>, vector<16x32xf32>, vector<1x32xf32> -> vector<1x32xf32>
    %c0_17 = arith.constant 0 : index
    %c0_18 = arith.constant 0 : index
    %36 = vector.load %arg6[%c0_17, %c0_18] : memref<1x32xf32, #tpu.memory_space<vmem>>, vector<1x32xf32>
    %37 = arith.addf %35, %36 : vector<1x32xf32>
    %c0_19 = arith.constant 0 : index
    %c0_20 = arith.constant 0 : index
    %38 = vector.load %arg7[%c0_19, %c0_20] : memref<16x32xf32, #tpu.memory_space<vmem>>, vector<16x32xf32>
    %cst_21 = arith.constant dense<0.000000e+00> : vector<1x32xf32>
    %39 = tpu.matmul %33, %38, %cst_21 {dimension_numbers = #tpu.dot_dimension_numbers<[1], [0], [0], [1], [0, 0, 1, 1], [], []>} : vector<1x16xf32>, vector<16x32xf32>, vector<1x32xf32> -> vector<1x32xf32>
    %c0_22 = arith.constant 0 : index
    %c0_23 = arith.constant 0 : index
    %40 = vector.load %arg8[%c0_22, %c0_23] : memref<1x32xf32, #tpu.memory_space<vmem>>, vector<1x32xf32>
    %41 = arith.addf %39, %40 : vector<1x32xf32>
    %cst_24 = arith.constant 1.000000e+00 : f32
    %42 = vector.broadcast %cst_24 : f32 to vector<1x32xf32>
    %43 = arith.addf %37, %42 : vector<1x32xf32>
    %44 = vector.broadcast %43 : vector<1x32xf32> to vector<8x32xf32>
    %45 = arith.mulf %25, %44 : vector<8x32xf32>
    %46 = vector.broadcast %41 : vector<1x32xf32> to vector<8x32xf32>
    %47 = arith.addf %45, %46 : vector<8x32xf32>
    %c0_25 = arith.constant 0 : index
    %c0_26 = arith.constant 0 : index
    %48 = vector.load %arg9[%c0_25, %c0_26] : memref<32x384xf32, #tpu.memory_space<vmem>>, vector<32x384xf32>
    %cst_27 = arith.constant dense<0.000000e+00> : vector<8x384xf32>
    %49 = tpu.matmul %47, %48, %cst_27 {dimension_numbers = #tpu.dot_dimension_numbers<[1], [0], [0], [1], [0, 0, 1, 1], [], []>} : vector<8x32xf32>, vector<32x384xf32>, vector<8x384xf32> -> vector<8x384xf32>
    %50 = vector.extract_strided_slice %49 {offsets = [0, 0], sizes = [8, 128], strides = [1, 1]} : vector<8x384xf32> to vector<8x128xf32>
    %cst_28 = arith.constant 0.176776692 : f32
    %51 = vector.broadcast %cst_28 : f32 to vector<8x128xf32>
    %52 = arith.mulf %50, %51 : vector<8x128xf32>
    %53 = vector.extract_strided_slice %49 {offsets = [0, 128], sizes = [8, 128], strides = [1, 1]} : vector<8x384xf32> to vector<8x128xf32>
    %54 = vector.extract_strided_slice %49 {offsets = [0, 256], sizes = [8, 128], strides = [1, 1]} : vector<8x384xf32> to vector<8x128xf32>
    %55 = vector.extract_strided_slice %52 {offsets = [0, 0], sizes = [8, 32], strides = [1, 1]} : vector<8x128xf32> to vector<8x32xf32>
    %56 = vector.extract_strided_slice %53 {offsets = [0, 0], sizes = [8, 32], strides = [1, 1]} : vector<8x128xf32> to vector<8x32xf32>
    %57 = vector.extract_strided_slice %54 {offsets = [0, 0], sizes = [8, 32], strides = [1, 1]} : vector<8x128xf32> to vector<8x32xf32>
    %cst_29 = arith.constant dense<0.000000e+00> : vector<8x8xf32>
    %58 = tpu.matmul %55, %56, %cst_29 {dimension_numbers = #tpu.dot_dimension_numbers<[1], [1], [0], [0], [0, 0, 1, 0], [], []>} : vector<8x32xf32>, vector<8x32xf32>, vector<8x8xf32> -> vector<8x8xf32>
    %cst_30 = arith.constant dense<0xFF800000> : vector<8xf32>
    %59 = vector.multi_reduction <maximumf>, %58, %cst_30 [1] : vector<8x8xf32> to vector<8xf32>
    %60 = vector.shape_cast %59 : vector<8xf32> to vector<8x1xf32>
    %61 = vector.broadcast %60 : vector<8x1xf32> to vector<8x8xf32>
    %62 = arith.subf %58, %61 : vector<8x8xf32>
    %63 = math.exp %62 : vector<8x8xf32>
    %cst_31 = arith.constant dense<0.000000e+00> : vector<8xf32>
    %64 = vector.multi_reduction <add>, %63, %cst_31 [1] : vector<8x8xf32> to vector<8xf32>
    %65 = vector.shape_cast %64 : vector<8xf32> to vector<8x1xf32>
    %66 = vector.broadcast %65 : vector<8x1xf32> to vector<8x8xf32>
    %67 = arith.divf %63, %66 : vector<8x8xf32>
    %cst_32 = arith.constant dense<0.000000e+00> : vector<8x32xf32>
    %68 = tpu.matmul %67, %57, %cst_32 {dimension_numbers = #tpu.dot_dimension_numbers<[1], [0], [0], [1], [0, 0, 1, 1], [], []>} : vector<8x8xf32>, vector<8x32xf32>, vector<8x32xf32> -> vector<8x32xf32>
    %69 = vector.extract_strided_slice %52 {offsets = [0, 32], sizes = [8, 32], strides = [1, 1]} : vector<8x128xf32> to vector<8x32xf32>
    %70 = vector.extract_strided_slice %53 {offsets = [0, 32], sizes = [8, 32], strides = [1, 1]} : vector<8x128xf32> to vector<8x32xf32>
    %71 = vector.extract_strided_slice %54 {offsets = [0, 32], sizes = [8, 32], strides = [1, 1]} : vector<8x128xf32> to vector<8x32xf32>
    %cst_33 = arith.constant dense<0.000000e+00> : vector<8x8xf32>
    %72 = tpu.matmul %69, %70, %cst_33 {dimension_numbers = #tpu.dot_dimension_numbers<[1], [1], [0], [0], [0, 0, 1, 0], [], []>} : vector<8x32xf32>, vector<8x32xf32>, vector<8x8xf32> -> vector<8x8xf32>
    %cst_34 = arith.constant dense<0xFF800000> : vector<8xf32>
    %73 = vector.multi_reduction <maximumf>, %72, %cst_34 [1] : vector<8x8xf32> to vector<8xf32>
    %74 = vector.shape_cast %73 : vector<8xf32> to vector<8x1xf32>
    %75 = vector.broadcast %74 : vector<8x1xf32> to vector<8x8xf32>
    %76 = arith.subf %72, %75 : vector<8x8xf32>
    %77 = math.exp %76 : vector<8x8xf32>
    %cst_35 = arith.constant dense<0.000000e+00> : vector<8xf32>
    %78 = vector.multi_reduction <add>, %77, %cst_35 [1] : vector<8x8xf32> to vector<8xf32>
    %79 = vector.shape_cast %78 : vector<8xf32> to vector<8x1xf32>
    %80 = vector.broadcast %79 : vector<8x1xf32> to vector<8x8xf32>
    %81 = arith.divf %77, %80 : vector<8x8xf32>
    %cst_36 = arith.constant dense<0.000000e+00> : vector<8x32xf32>
    %82 = tpu.matmul %81, %71, %cst_36 {dimension_numbers = #tpu.dot_dimension_numbers<[1], [0], [0], [1], [0, 0, 1, 1], [], []>} : vector<8x8xf32>, vector<8x32xf32>, vector<8x32xf32> -> vector<8x32xf32>
    %83 = vector.extract_strided_slice %52 {offsets = [0, 64], sizes = [8, 32], strides = [1, 1]} : vector<8x128xf32> to vector<8x32xf32>
    %84 = vector.extract_strided_slice %53 {offsets = [0, 64], sizes = [8, 32], strides = [1, 1]} : vector<8x128xf32> to vector<8x32xf32>
    %85 = vector.extract_strided_slice %54 {offsets = [0, 64], sizes = [8, 32], strides = [1, 1]} : vector<8x128xf32> to vector<8x32xf32>
    %cst_37 = arith.constant dense<0.000000e+00> : vector<8x8xf32>
    %86 = tpu.matmul %83, %84, %cst_37 {dimension_numbers = #tpu.dot_dimension_numbers<[1], [1], [0], [0], [0, 0, 1, 0], [], []>} : vector<8x32xf32>, vector<8x32xf32>, vector<8x8xf32> -> vector<8x8xf32>
    %cst_38 = arith.constant dense<0xFF800000> : vector<8xf32>
    %87 = vector.multi_reduction <maximumf>, %86, %cst_38 [1] : vector<8x8xf32> to vector<8xf32>
    %88 = vector.shape_cast %87 : vector<8xf32> to vector<8x1xf32>
    %89 = vector.broadcast %88 : vector<8x1xf32> to vector<8x8xf32>
    %90 = arith.subf %86, %89 : vector<8x8xf32>
    %91 = math.exp %90 : vector<8x8xf32>
    %cst_39 = arith.constant dense<0.000000e+00> : vector<8xf32>
    %92 = vector.multi_reduction <add>, %91, %cst_39 [1] : vector<8x8xf32> to vector<8xf32>
    %93 = vector.shape_cast %92 : vector<8xf32> to vector<8x1xf32>
    %94 = vector.broadcast %93 : vector<8x1xf32> to vector<8x8xf32>
    %95 = arith.divf %91, %94 : vector<8x8xf32>
    %cst_40 = arith.constant dense<0.000000e+00> : vector<8x32xf32>
    %96 = tpu.matmul %95, %85, %cst_40 {dimension_numbers = #tpu.dot_dimension_numbers<[1], [0], [0], [1], [0, 0, 1, 1], [], []>} : vector<8x8xf32>, vector<8x32xf32>, vector<8x32xf32> -> vector<8x32xf32>
    %97 = vector.extract_strided_slice %52 {offsets = [0, 96], sizes = [8, 32], strides = [1, 1]} : vector<8x128xf32> to vector<8x32xf32>
    %98 = vector.extract_strided_slice %53 {offsets = [0, 96], sizes = [8, 32], strides = [1, 1]} : vector<8x128xf32> to vector<8x32xf32>
    %99 = vector.extract_strided_slice %54 {offsets = [0, 96], sizes = [8, 32], strides = [1, 1]} : vector<8x128xf32> to vector<8x32xf32>
    %cst_41 = arith.constant dense<0.000000e+00> : vector<8x8xf32>
    %100 = tpu.matmul %97, %98, %cst_41 {dimension_numbers = #tpu.dot_dimension_numbers<[1], [1], [0], [0], [0, 0, 1, 0], [], []>} : vector<8x32xf32>, vector<8x32xf32>, vector<8x8xf32> -> vector<8x8xf32>
    %cst_42 = arith.constant dense<0xFF800000> : vector<8xf32>
    %101 = vector.multi_reduction <maximumf>, %100, %cst_42 [1] : vector<8x8xf32> to vector<8xf32>
    %102 = vector.shape_cast %101 : vector<8xf32> to vector<8x1xf32>
    %103 = vector.broadcast %102 : vector<8x1xf32> to vector<8x8xf32>
    %104 = arith.subf %100, %103 : vector<8x8xf32>
    %105 = math.exp %104 : vector<8x8xf32>
    %cst_43 = arith.constant dense<0.000000e+00> : vector<8xf32>
    %106 = vector.multi_reduction <add>, %105, %cst_43 [1] : vector<8x8xf32> to vector<8xf32>
    %107 = vector.shape_cast %106 : vector<8xf32> to vector<8x1xf32>
    %108 = vector.broadcast %107 : vector<8x1xf32> to vector<8x8xf32>
    %109 = arith.divf %105, %108 : vector<8x8xf32>
    %cst_44 = arith.constant dense<0.000000e+00> : vector<8x32xf32>
    %110 = tpu.matmul %109, %99, %cst_44 {dimension_numbers = #tpu.dot_dimension_numbers<[1], [0], [0], [1], [0, 0, 1, 1], [], []>} : vector<8x8xf32>, vector<8x32xf32>, vector<8x32xf32> -> vector<8x32xf32>
    %111 = tpu.concatenate %68, %82, %96, %110 in 1 : vector<8x32xf32>, vector<8x32xf32>, vector<8x32xf32>, vector<8x32xf32> -> vector<8x128xf32>
    %c0_45 = arith.constant 0 : index
    %c0_46 = arith.constant 0 : index
    %112 = vector.load %arg10[%c0_45, %c0_46] : memref<128x32xf32, #tpu.memory_space<vmem>>, vector<128x32xf32>
    %cst_47 = arith.constant dense<0.000000e+00> : vector<8x32xf32>
    %113 = tpu.matmul %111, %112, %cst_47 {dimension_numbers = #tpu.dot_dimension_numbers<[1], [0], [0], [1], [0, 0, 1, 1], [], []>} : vector<8x128xf32>, vector<128x32xf32>, vector<8x32xf32> -> vector<8x32xf32>
    %c0_48 = arith.constant 0 : index
    %c0_49 = arith.constant 0 : index
    %c0_50 = arith.constant 0 : index
    %114 = vector.load %arg11[%c0_48, %c0_49, %c0_50] : memref<1x8x32xf32, #tpu.memory_space<vmem>>, vector<1x8x32xf32>
    %115 = vector.shape_cast %114 : vector<1x8x32xf32> to vector<8x32xf32>
    %116 = vector.shape_cast %113 : vector<8x32xf32> to vector<1x8x32xf32>
    tpu.vector_store %arg11[%c0_48, %c0_49, %c0_50], %116 {strides = array<i32>} : memref<1x8x32xf32, #tpu.memory_space<vmem>>, vector<1x8x32xf32>,
    return
  }
  func.func @transform_0(%arg0: i32) -> (i32, i32, i32) {
    %c0_i32 = arith.constant 0 : i32
    %c0_i32_0 = arith.constant 0 : i32
    %c0_i32_1 = arith.constant 0 : i32
    return %arg0, %c0_i32, %c0_i32_0 : i32, i32, i32
  }
  func.func @transform_1(%arg0: i32) -> (i32, i32, i32) {
    %c0_i32 = arith.constant 0 : i32
    %c0_i32_0 = arith.constant 0 : i32
    %c0_i32_1 = arith.constant 0 : i32
    return %arg0, %c0_i32, %c0_i32_0 : i32, i32, i32
  }
  func.func @transform_2(%arg0: i32) -> (i32, i32) {
    %c0_i32 = arith.constant 0 : i32
    %c0_i32_0 = arith.constant 0 : i32
    %c0_i32_1 = arith.constant 0 : i32
    return %c0_i32, %c0_i32_0 : i32, i32
  }
  func.func @transform_3(%arg0: i32) -> (i32, i32) {
    %c0_i32 = arith.constant 0 : i32
    %c0_i32_0 = arith.constant 0 : i32
    %c0_i32_1 = arith.constant 0 : i32
    return %c0_i32, %c0_i32_0 : i32, i32
  }
  func.func @transform_4(%arg0: i32) -> (i32, i32) {
    %c0_i32 = arith.constant 0 : i32
    %c0_i32_0 = arith.constant 0 : i32
    %c0_i32_1 = arith.constant 0 : i32
    return %c0_i32, %c0_i32_0 : i32, i32
  }
  func.func @transform_5(%arg0: i32) -> (i32, i32) {
    %c0_i32 = arith.constant 0 : i32
    %c0_i32_0 = arith.constant 0 : i32
    %c0_i32_1 = arith.constant 0 : i32
    return %c0_i32, %c0_i32_0 : i32, i32
  }
  func.func @transform_6(%arg0: i32) -> (i32, i32) {
    %c0_i32 = arith.constant 0 : i32
    %c0_i32_0 = arith.constant 0 : i32
    %c0_i32_1 = arith.constant 0 : i32
    return %c0_i32, %c0_i32_0 : i32, i32
  }
  func.func @transform_7(%arg0: i32) -> (i32, i32) {
    %c0_i32 = arith.constant 0 : i32
    %c0_i32_0 = arith.constant 0 : i32
    %c0_i32_1 = arith.constant 0 : i32
    return %c0_i32, %c0_i32_0 : i32, i32
  }
  func.func @transform_8(%arg0: i32) -> (i32, i32) {
    %c0_i32 = arith.constant 0 : i32
    %c0_i32_0 = arith.constant 0 : i32
    %c0_i32_1 = arith.constant 0 : i32
    return %c0_i32, %c0_i32_0 : i32, i32
  }
  func.func @transform_9(%arg0: i32) -> (i32, i32) {
    %c0_i32 = arith.constant 0 : i32
    %c0_i32_0 = arith.constant 0 : i32
    %c0_i32_1 = arith.constant 0 : i32
    return %c0_i32, %c0_i32_0 : i32, i32
  }
  func.func @transform_10(%arg0: i32) -> (i32, i32, i32) {
    %c0_i32 = arith.constant 0 : i32
    %c0_i32_0 = arith.constant 0 : i32
    %c0_i32_1 = arith.constant 0 : i32
    return %arg0, %c0_i32, %c0_i32_0 : i32, i32, i32
  }
}

</mosaic_0001>

<llo_original>
// kernel: tpu_custom_call.1
$region0: #{tpu_custom_call.1}
  #allocation0 [shape = 'u32[]', space=smem, size = 0x4, offset = 0x4, fixed_abs, tag = 'smem constant byte address 0x4 - core index']
  #allocation1 [shape = 'u32[144,128]{1,0:T(1,128)}', space=vmem, size = 0x12000, scoped, tag = 'internal scratch']
  %s0 = inlined_call_operand.vmem [shape: f32[2,8,32], index: 0, kind: input, shape index: {}]
  %s1 = inlined_call_operand.vmem [shape: f32[2,1,16], index: 1, kind: input, shape index: {}]
  %s2 = inlined_call_operand.vmem [shape: f32[1,32], index: 2, kind: input, shape index: {}]
  %s3 = inlined_call_operand.vmem [shape: f32[1,32], index: 3, kind: input, shape index: {}]
  %s4 = inlined_call_operand.vmem [shape: f32[16,32], index: 4, kind: input, shape index: {}]
  %s5 = inlined_call_operand.vmem [shape: f32[1,32], index: 5, kind: input, shape index: {}]
  %s6 = inlined_call_operand.vmem [shape: f32[16,32], index: 6, kind: input, shape index: {}]
  %s7 = inlined_call_operand.vmem [shape: f32[1,32], index: 7, kind: input, shape index: {}]
  %s8 = inlined_call_operand.vmem [shape: f32[32,384], index: 8, kind: input, shape index: {}]
  %s9 = inlined_call_operand.vmem [shape: f32[128,32], index: 9, kind: input, shape index: {}]
  %s10 = inlined_call_operand.hbm [shape: f32[2,8,32], index: 10, kind: output, shape index: {}]
  %s11 = sld [smem:[#allocation0]]
  $region73: #{tpu_custom_call.1} parent=0
    _
  %s13 = ssub.s32 1, %s11
  %s14 = scalar_select 0, %s13, %s11
  $region1: #{tpu_custom_call.1} parent=0
    #allocation2 [shape = 'u8[8192]{0}', space=vmem, size = 0x2000, scoped, tag = 'output window, operand 0']
    #allocation3 [shape = 's32[2]{0}', space=sflag, size = 0x8, scoped, tag = 'scoped memory for tpu_custom_call.1']
    %15 = vsyncpa [#allocation3], 0
    %s16 = scalar_lea.sflag [#allocation3], 1
    %17 = vsyncpa %s16, 0
    loop: start=0, step=1, limit=4
    $region2: #{tpu_custom_call.1} parent=1 // loop_pre_header
      _
    $region3: #{tpu_custom_call.1} parent=1 // loop_header
      %s19 = sphi 0, %s23
      %p20 = scmp.ge.s32.totalorder %s19, 4
      %s29 = sphi 0, %s31
      %s32 = sphi 0, %s29
      %s33 = sphi 0, %s32
      %s49 = sphi 0, %s33
      %s55 = sphi 0, %s57
      %s58 = sphi 0, %s55
      %s59 = sphi 0, %s58
      %s75 = sphi 0, %s59
      %s79 = sphi 0, %s79
      %s81 = sphi 0, %s79
      %s82 = sphi 0, %s81
      %s96 = sphi 0, %s82
      %s100 = sphi 0, %s100
      %s102 = sphi 0, %s100
      %s103 = sphi 0, %s102
      %s117 = sphi 0, %s103
      %s121 = sphi 0, %s121
      %s123 = sphi 0, %s121
      %s124 = sphi 0, %s123
      %s138 = sphi 0, %s124
      %s142 = sphi 0, %s142
      %s144 = sphi 0, %s142
      %s145 = sphi 0, %s144
      %s159 = sphi 0, %s145
      %s163 = sphi 0, %s163
      %s165 = sphi 0, %s163
      %s166 = sphi 0, %s165
      %s180 = sphi 0, %s166
      %s184 = sphi 0, %s184
      %s186 = sphi 0, %s184
      %s187 = sphi 0, %s186
      %s201 = sphi 0, %s187
      %s205 = sphi 0, %s205
      %s207 = sphi 0, %s205
      %s208 = sphi 0, %s207
      %s222 = sphi 0, %s208
      %s226 = sphi 0, %s226
      %s228 = sphi 0, %s226
      %s229 = sphi 0, %s228
      %s243 = sphi 0, %s229
      %s249 = sphi 0, %s251
      %s252 = sphi 0, %s249
      %s253 = sphi 0, %s252
      %s269 = sphi 0, %s253
    $region4: #{tpu_custom_call.1} parent=1 // loop_header_branch
      %22 = sbr.rel (%p20) target = $region8
    $region5: #{tpu_custom_call.1} parent=1 // loop_body
      %s24 = ssub.s32 %s19, 1
      %s25 = ssub.s32 %s19, 2
      %s26 = sadd.s32 %s19, 1
      %s27 = ssub.s32 %s19, %s26
      %p28 = scmp.eq.s32.totalorder %s27, 0
      %s30 = sadd.s32 %s29, 1
      %s31 = scalar_select %p28, %s29, %s30
      %p34 = pneg %p28
      %p35 = scmp.eq.s32.totalorder %s19, 1
      %p36 = por %p34, %p35
      %p37 = scmp.ne.s32.totalorder %s29, %s32
      %p38 = scmp.eq.s32.totalorder %s19, 0
      %p39 = por %p37, %p38
      %p40 = scmp.ne.s32.totalorder %s29, %s32
      %p41 = scmp.eq.s32.totalorder %s24, 1
      %p42 = por %p40, %p41
      %p43 = scmp.ne.s32.totalorder %s32, %s33
      %p44 = scmp.eq.s32.totalorder %s24, 0
      %p45 = por %p43, %p44
      %p46 = scmp.ne.s32.totalorder %s32, %s33
      %p47 = scmp.eq.s32.totalorder %s25, 1
      %p48 = por %p46, %p47
      %p50 = scmp.ne.s32.totalorder %s33, %s49
      %p51 = scmp.eq.s32.totalorder %s25, 0
      %p52 = por %p50, %p51
      %s53 = ssub.s32 %s19, %s26
      %p54 = scmp.eq.s32.totalorder %s53, 0
      %s56 = sadd.s32 %s55, 1
      %s57 = scalar_select %p54, %s55, %s56
      %p60 = pneg %p54
      %p61 = scmp.eq.s32.totalorder %s19, 1
      %p62 = por %p60, %p61
      %p63 = scmp.ne.s32.totalorder %s55, %s58
      %p64 = scmp.eq.s32.totalorder %s19, 0
      %p65 = por %p63, %p64
      %p66 = scmp.ne.s32.totalorder %s55, %s58
      %p67 = scmp.eq.s32.totalorder %s24, 1
      %p68 = por %p66, %p67
      %p69 = scmp.ne.s32.totalorder %s58, %s59
      %p70 = scmp.eq.s32.totalorder %s24, 0
      %p71 = por %p69, %p70
      %p72 = scmp.ne.s32.totalorder %s58, %s59
      %p73 = scmp.eq.s32.totalorder %s25, 1
      %p74 = por %p72, %p73
      %p76 = scmp.ne.s32.totalorder %s59, %s75
      %p77 = scmp.eq.s32.totalorder %s25, 0
      %p78 = por %p76, %p77
      %s80 = sadd.s32 %s79, 1
      %p83 = scmp.eq.s32.totalorder %s19, 1
      %p84 = scmp.ne.s32.totalorder %s79, %s81
      %p85 = scmp.eq.s32.totalorder %s19, 0
      %p86 = por %p84, %p85
      %p87 = scmp.ne.s32.totalorder %s79, %s81
      %p88 = scmp.eq.s32.totalorder %s24, 1
      %p89 = por %p87, %p88
      %p90 = scmp.ne.s32.totalorder %s81, %s82
      %p91 = scmp.eq.s32.totalorder %s24, 0
      %p92 = por %p90, %p91
      %p93 = scmp.ne.s32.totalorder %s81, %s82
      %p94 = scmp.eq.s32.totalorder %s25, 1
      %p95 = por %p93, %p94
      %p97 = scmp.ne.s32.totalorder %s82, %s96
      %p98 = scmp.eq.s32.totalorder %s25, 0
      %p99 = por %p97, %p98
      %s101 = sadd.s32 %s100, 1
      %p104 = scmp.eq.s32.totalorder %s19, 1
      %p105 = scmp.ne.s32.totalorder %s100, %s102
      %p106 = scmp.eq.s32.totalorder %s19, 0
      %p107 = por %p105, %p106
      %p108 = scmp.ne.s32.totalorder %s100, %s102
      %p109 = scmp.eq.s32.totalorder %s24, 1
      %p110 = por %p108, %p109
      %p111 = scmp.ne.s32.totalorder %s102, %s103
      %p112 = scmp.eq.s32.totalorder %s24, 0
      %p113 = por %p111, %p112
      %p114 = scmp.ne.s32.totalorder %s102, %s103
      %p115 = scmp.eq.s32.totalorder %s25, 1
      %p116 = por %p114, %p115
      %p118 = scmp.ne.s32.totalorder %s103, %s117
      %p119 = scmp.eq.s32.totalorder %s25, 0
      %p120 = por %p118, %p119
      %s122 = sadd.s32 %s121, 1
      %p125 = scmp.eq.s32.totalorder %s19, 1
      %p126 = scmp.ne.s32.totalorder %s121, %s123
      %p127 = scmp.eq.s32.totalorder %s19, 0
      %p128 = por %p126, %p127
      %p129 = scmp.ne.s32.totalorder %s121, %s123
      %p130 = scmp.eq.s32.totalorder %s24, 1
      %p131 = por %p129, %p130
      %p132 = scmp.ne.s32.totalorder %s123, %s124
      %p133 = scmp.eq.s32.totalorder %s24, 0
      %p134 = por %p132, %p133
      %p135 = scmp.ne.s32.totalorder %s123, %s124
      %p136 = scmp.eq.s32.totalorder %s25, 1
      %p137 = por %p135, %p136
      %p139 = scmp.ne.s32.totalorder %s124, %s138
      %p140 = scmp.eq.s32.totalorder %s25, 0
      %p141 = por %p139, %p140
      %s143 = sadd.s32 %s142, 1
      %p146 = scmp.eq.s32.totalorder %s19, 1
      %p147 = scmp.ne.s32.totalorder %s142, %s144
      %p148 = scmp.eq.s32.totalorder %s19, 0
      %p149 = por %p147, %p148
      %p150 = scmp.ne.s32.totalorder %s142, %s144
      %p151 = scmp.eq.s32.totalorder %s24, 1
      %p152 = por %p150, %p151
      %p153 = scmp.ne.s32.totalorder %s144, %s145
      %p154 = scmp.eq.s32.totalorder %s24, 0
      %p155 = por %p153, %p154
      %p156 = scmp.ne.s32.totalorder %s144, %s145
      %p157 = scmp.eq.s32.totalorder %s25, 1
      %p158 = por %p156, %p157
      %p160 = scmp.ne.s32.totalorder %s145, %s159
      %p161 = scmp.eq.s32.totalorder %s25, 0
      %p162 = por %p160, %p161
      %s164 = sadd.s32 %s163, 1
      %p167 = scmp.eq.s32.totalorder %s19, 1
      %p168 = scmp.ne.s32.totalorder %s163, %s165
      %p169 = scmp.eq.s32.totalorder %s19, 0
      %p170 = por %p168, %p169
      %p171 = scmp.ne.s32.totalorder %s163, %s165
      %p172 = scmp.eq.s32.totalorder %s24, 1
      %p173 = por %p171, %p172
      %p174 = scmp.ne.s32.totalorder %s165, %s166
      %p175 = scmp.eq.s32.totalorder %s24, 0
      %p176 = por %p174, %p175
      %p177 = scmp.ne.s32.totalorder %s165, %s166
      %p178 = scmp.eq.s32.totalorder %s25, 1
      %p179 = por %p177, %p178
      %p181 = scmp.ne.s32.totalorder %s166, %s180
      %p182 = scmp.eq.s32.totalorder %s25, 0
      %p183 = por %p181, %p182
      %s185 = sadd.s32 %s184, 1
      %p188 = scmp.eq.s32.totalorder %s19, 1
      %p189 = scmp.ne.s32.totalorder %s184, %s186
      %p190 = scmp.eq.s32.totalorder %s19, 0
      %p191 = por %p189, %p190
      %p192 = scmp.ne.s32.totalorder %s184, %s186
      %p193 = scmp.eq.s32.totalorder %s24, 1
      %p194 = por %p192, %p193
      %p195 = scmp.ne.s32.totalorder %s186, %s187
      %p196 = scmp.eq.s32.totalorder %s24, 0
      %p197 = por %p195, %p196
      %p198 = scmp.ne.s32.totalorder %s186, %s187
      %p199 = scmp.eq.s32.totalorder %s25, 1
      %p200 = por %p198, %p199
      %p202 = scmp.ne.s32.totalorder %s187, %s201
      %p203 = scmp.eq.s32.totalorder %s25, 0
      %p204 = por %p202, %p203
      %s206 = sadd.s32 %s205, 1
      %p209 = scmp.eq.s32.totalorder %s19, 1
      %p210 = scmp.ne.s32.totalorder %s205, %s207
      %p211 = scmp.eq.s32.totalorder %s19, 0
      %p212 = por %p210, %p211
      %p213 = scmp.ne.s32.totalorder %s205, %s207
      %p214 = scmp.eq.s32.totalorder %s24, 1
      %p215 = por %p213, %p214
      %p216 = scmp.ne.s32.totalorder %s207, %s208
      %p217 = scmp.eq.s32.totalorder %s24, 0
      %p218 = por %p216, %p217
      %p219 = scmp.ne.s32.totalorder %s207, %s208
      %p220 = scmp.eq.s32.totalorder %s25, 1
      %p221 = por %p219, %p220
      %p223 = scmp.ne.s32.totalorder %s208, %s222
      %p224 = scmp.eq.s32.totalorder %s25, 0
      %p225 = por %p223, %p224
      %s227 = sadd.s32 %s226, 1
      %p230 = scmp.eq.s32.totalorder %s19, 1
      %p231 = scmp.ne.s32.totalorder %s226, %s228
      %p232 = scmp.eq.s32.totalorder %s19, 0
      %p233 = por %p231, %p232
      %p234 = scmp.ne.s32.totalorder %s226, %s228
      %p235 = scmp.eq.s32.totalorder %s24, 1
      %p236 = por %p234, %p235
      %p237 = scmp.ne.s32.totalorder %s228, %s229
      %p238 = scmp.eq.s32.totalorder %s24, 0
      %p239 = por %p237, %p238
      %p240 = scmp.ne.s32.totalorder %s228, %s229
      %p241 = scmp.eq.s32.totalorder %s25, 1
      %p242 = por %p240, %p241
      %p244 = scmp.ne.s32.totalorder %s229, %s243
      %p245 = scmp.eq.s32.totalorder %s25, 0
      %p246 = por %p244, %p245
      %s247 = ssub.s32 %s19, %s26
      %p248 = scmp.eq.s32.totalorder %s247, 0
      %s250 = sadd.s32 %s249, 1
      %s251 = scalar_select %p248, %s249, %s250
      %p254 = pneg %p248
      %p255 = scmp.eq.s32.totalorder %s19, 1
      %p256 = por %p254, %p255
      %p257 = scmp.ne.s32.totalorder %s249, %s252
      %p258 = scmp.eq.s32.totalorder %s19, 0
      %p259 = por %p257, %p258
      %p260 = scmp.ne.s32.totalorder %s249, %s252
      %p261 = scmp.eq.s32.totalorder %s24, 1
      %p262 = por %p260, %p261
      %p263 = scmp.ne.s32.totalorder %s252, %s253
      %p264 = scmp.eq.s32.totalorder %s24, 0
      %p265 = por %p263, %p264
      %p266 = scmp.ne.s32.totalorder %s252, %s253
      %p267 = scmp.eq.s32.totalorder %s25, 1
      %p268 = por %p266, %p267
      %p270 = scmp.ne.s32.totalorder %s253, %s269
      %p271 = scmp.eq.s32.totalorder %s25, 0
      %p272 = por %p270, %p271
      %p273 = scmp.le.s32.totalorder 1, %s19
      %p274 = scmp.lt.s32.totalorder %s19, 3
      %p275 = pnand %p273, %p274
      %p276 = pneg %p275
      // Predicated region
      $region9: #{tpu_custom_call.1} parent=5 // pred_check
        _
      $region10: #{tpu_custom_call.1} parent=5 // pred_check_branch
        %278 = sbr.rel (%p275) target = $region12
      $region11: #{tpu_custom_call.1} parent=5 // pred_region
        %s279 = ssub.s32 %s19, 1
        // Predicated region
        $region13: #{tpu_custom_call.1} parent=11 // pred_check
          %p280 = pneg %p92
        $region14: #{tpu_custom_call.1} parent=11 // pred_check_branch
          %282 = sbr.rel (%p280) target = $region16
        $region15: #{tpu_custom_call.1} parent=11 // pred_region
          _
        $region16: #{tpu_custom_call.1} parent=11 // pred_fallthru
          _
        // Predicated region
        $region17: #{tpu_custom_call.1} parent=11 // pred_check
          %p283 = pneg %p113
        $region18: #{tpu_custom_call.1} parent=11 // pred_check_branch
          %285 = sbr.rel (%p283) target = $region20
        $region19: #{tpu_custom_call.1} parent=11 // pred_region
          _
        $region20: #{tpu_custom_call.1} parent=11 // pred_fallthru
          _
        // Predicated region
        $region21: #{tpu_custom_call.1} parent=11 // pred_check
          %p286 = pneg %p134
        $region22: #{tpu_custom_call.1} parent=11 // pred_check_branch
          %288 = sbr.rel (%p286) target = $region24
        $region23: #{tpu_custom_call.1} parent=11 // pred_region
          _
        $region24: #{tpu_custom_call.1} parent=11 // pred_fallthru
          _
        // Predicated region
        $region25: #{tpu_custom_call.1} parent=11 // pred_check
          %p289 = pneg %p155
        $region26: #{tpu_custom_call.1} parent=11 // pred_check_branch
          %291 = sbr.rel (%p289) target = $region28
        $region27: #{tpu_custom_call.1} parent=11 // pred_region
          _
        $region28: #{tpu_custom_call.1} parent=11 // pred_fallthru
          _
        // Predicated region
        $region29: #{tpu_custom_call.1} parent=11 // pred_check
          %p292 = pneg %p176
        $region30: #{tpu_custom_call.1} parent=11 // pred_check_branch
          %294 = sbr.rel (%p292) target = $region32
        $region31: #{tpu_custom_call.1} parent=11 // pred_region
          _
        $region32: #{tpu_custom_call.1} parent=11 // pred_fallthru
          _
        // Predicated region
        $region33: #{tpu_custom_call.1} parent=11 // pred_check
          %p295 = pneg %p197
        $region34: #{tpu_custom_call.1} parent=11 // pred_check_branch
          %297 = sbr.rel (%p295) target = $region36
        $region35: #{tpu_custom_call.1} parent=11 // pred_region
          _
        $region36: #{tpu_custom_call.1} parent=11 // pred_fallthru
          _
        // Predicated region
        $region37: #{tpu_custom_call.1} parent=11 // pred_check
          %p298 = pneg %p218
        $region38: #{tpu_custom_call.1} parent=11 // pred_check_branch
          %300 = sbr.rel (%p298) target = $region40
        $region39: #{tpu_custom_call.1} parent=11 // pred_region
          _
        $region40: #{tpu_custom_call.1} parent=11 // pred_fallthru
          _
        // Predicated region
        $region41: #{tpu_custom_call.1} parent=11 // pred_check
          %p301 = pneg %p239
        $region42: #{tpu_custom_call.1} parent=11 // pred_check_branch
          %303 = sbr.rel (%p301) target = $region44
        $region43: #{tpu_custom_call.1} parent=11 // pred_region
          _
        $region44: #{tpu_custom_call.1} parent=11 // pred_fallthru
          _
      $region12: #{tpu_custom_call.1} parent=5 // pred_fallthru
        _
      %p304 = scmp.lt.s32.totalorder %s19, 2
      // Predicated region
      $region45: #{tpu_custom_call.1} parent=5 // pred_check
        %p305 = pneg %p304
      $region46: #{tpu_custom_call.1} parent=5 // pred_check_branch
        %307 = sbr.rel (%p305) target = $region48
      $region47: #{tpu_custom_call.1} parent=5 // pred_region
        // Predicated region
        $region49: #{tpu_custom_call.1} parent=47 // pred_check
          %p308 = pneg %p39
        $region50: #{tpu_custom_call.1} parent=47 // pred_check_branch
          %310 = sbr.rel (%p308) target = $region52
        $region51: #{tpu_custom_call.1} parent=47 // pred_region
          %p311 = scmp.lt.s32.totalorder %s19, 1
          %s312 = scalar_select %p311, %s19, 1
          %s313 = smul.addr %s312, 8
          %s314 = scalar_lea.vmem %s0, %s313
        $region52: #{tpu_custom_call.1} parent=47 // pred_fallthru
          _
        // Predicated region
        $region53: #{tpu_custom_call.1} parent=47 // pred_check
          %p315 = pneg %p65
        $region54: #{tpu_custom_call.1} parent=47 // pred_check_branch
          %317 = sbr.rel (%p315) target = $region56
        $region55: #{tpu_custom_call.1} parent=47 // pred_region
          %p318 = scmp.lt.s32.totalorder %s19, 1
          %s319 = scalar_select %p318, %s19, 1
          %s320 = scalar_lea.vmem %s1, %s319
        $region56: #{tpu_custom_call.1} parent=47 // pred_fallthru
          _
      $region48: #{tpu_custom_call.1} parent=5 // pred_fallthru
        _
      %p321 = scmp.le.s32.totalorder 1, %s19
      %p322 = scmp.lt.s32.totalorder %s19, 3
      %p323 = pnand %p321, %p322
      %p324 = pneg %p323
      // Predicated region
      $region57: #{tpu_custom_call.1} parent=5 // pred_check
        _
      $region58: #{tpu_custom_call.1} parent=5 // pred_check_branch
        %326 = sbr.rel (%p323) target = $region60
      $region59: #{tpu_custom_call.1} parent=5 // pred_region
        %s327 = ssub.s32 %s19, 1
        %p328 = scmp.lt.s32.totalorder %s24, 1
        %s329 = scalar_select %p328, %s24, 1
        %s330 = smul.addr %s329, 8
        %s331 = scalar_lea.vmem %s0, %s330
        %p332 = pneg %p45
        %p333 = pneg %p42
        %p334 = scmp.lt.s32.totalorder %s24, 1
        %s335 = scalar_select %p334, %s24, 1
        %s336 = scalar_lea.vmem %s1, %s335
        %p337 = pneg %p71
        %p338 = pneg %p68
        %p339 = pneg %p92
        %p340 = pneg %p89
        %p341 = pneg %p113
        %p342 = pneg %p110
        %p343 = pneg %p134
        %p344 = pneg %p131
        %p345 = pneg %p155
        %p346 = pneg %p152
        %p347 = pneg %p176
        %p348 = pneg %p173
        %p349 = pneg %p197
        %p350 = pneg %p194
        %p351 = pneg %p218
        %p352 = pneg %p215
        %p353 = pneg %p239
        %p354 = pneg %p236
        %p355 = pneg %p265
        %p356 = pneg %p262
        %s357 = sand.u32 %s252, 1
        %s358 = scalar_lea.sflag [#allocation3], %s357
        %s359 = sand.u32 %s252, 1
        %s360 = smul.addr %s359, 8
        %s361 = scalar_lea.vmem [#allocation2], %s360
        %p362 = scmp.lt.s32.totalorder %s24, 1
        %s363 = scalar_select %p362, %s24, 1
        %s364 = smul.addr %s363, 8
        %s365 = scalar_lea.vmem %s0, %s364
        %p366 = scmp.lt.s32.totalorder %s24, 1
        %s367 = scalar_select %p366, %s24, 1
        %s368 = scalar_lea.vmem %s1, %s367
        %v369 = vld [vmem:[%s365] sm:$0xff]
        %v370 = vld [vmem:[%s2] sm:$0x1]
        %v371 = vld [vmem:[%s3] sm:$0x1]
        %vm372 = vcmask 261120
        %v373 = vsel %vm372, %v369, 0.0
        %374 = vadd.xlane.f32.xlu0 %v373
        %v375 = vpop.xlane.xlu0 %374
        %v376 = vrcp.pop 32.0
        %v377 = vmul.f32 %v375, %v376
        %v378 = vsub.f32 %v369, %v377
        %v379 = vmul.f32 %v378, %v378
        %v380 = vsel %vm372, %v379, 0.0
        %381 = vadd.xlane.f32.xlu0 %v380
        %v382 = vpop.xlane.xlu0 %381
        %v383 = vmul.f32 %v382, %v376
        %v384 = vadd.f32 %v383, 1e-05
        %v385 = vrsqrt.pop %v384
        %v386 = vmul.f32 %v378, %v385
        %v388 = vlaneseq
        %v389 = vshrl.u32 %v388, 7
        %v390 = vsub.s32 0, %v389
        %v391 = vrot.slane %v370, %v390
        %v393 = vmul.f32 %v386, %v391
        %v395 = vlaneseq
        %v396 = vshrl.u32 %v395, 7
        %v397 = vsub.s32 0, %v396
        %v398 = vrot.slane %v371, %v397
        %v400 = vadd.f32 %v393, %v398
        %v401 = vld [vmem:[%s368] sm:$0x1]
        %v402 = vxor.u32 %v401, 2147483648
        %v403 = vmul.f32 %v402, 1.442695
        %v404 = vpow.pop %v403
        %v405 = vadd.f32 %v404, 1.0
        %v406 = vrcp.pop %v405
        %v407 = vmul.f32 1.0, %v406
        %v408 = vmul.f32 %v401, %v407
        %v409 = vld [vmem:[%s4] sm:$0xff]
        %v410 = vld [vmem:[%s4 + $0x8] sm:$0xff]
        %v411 = vld [vmem:[%s5] sm:$0x1]
        %vm412 = vcmask 130048
        %v414 = vsel %vm412, %v408, 0
        %416 = vmatprep.subr.mxu0 0.0
        %417 = vmatpush1.msra.mxu0 %v409
        %418 = vmatprep.subr.mxu0 0.0
        %419 = vmatpush1.msra.mxu0 %v410
        %420 = vmatprep.subr.mxu0 0.0
        %421 = vmatpush1.msra.mxu0 0.0
        %422 = vmatprep.subr.mxu0 0.0
        %423 = vmatpush1.msra.mxu0 0.0
        %424 = vmatprep.subr.mxu0 0.0
        %425 = vmatpush1.msra.mxu0 0.0
        %426 = vmatprep.subr.mxu0 0.0
        %427 = vmatpush1.msra.mxu0 0.0
        %428 = vmatprep.subr.mxu0 0.0
        %429 = vmatpush1.msra.mxu0 0.0
        %430 = vmatprep.subr.mxu0 0.0
        %431 = vmatpush1.msra.mxu0 0.0
        %432 = vmatprep.subr.mxu0 0.0
        %433 = vmatpush1.msra.mxu0 0.0
        %434 = vmatprep.subr.mxu0 0.0
        %435 = vmatpush1.msra.mxu0 0.0
        %436 = vmatprep.subr.mxu0 0.0
        %437 = vmatpush1.msra.mxu0 0.0
        %438 = vmatprep.subr.mxu0 0.0
        %439 = vmatpush1.msra.mxu0 0.0
        %440 = vmatprep.subr.mxu0 0.0
        %441 = vmatpush1.msra.mxu0 0.0
        %442 = vmatprep.subr.mxu0 0.0
        %443 = vmatpush1.msra.mxu0 0.0
        %444 = vmatprep.subr.mxu0 0.0
        %445 = vmatpush1.msra.mxu0 0.0
        %446 = vmatprep.subr.mxu0 0.0
        %447 = vmatpush1.msra.mxu0 0.0
        %448 = vmatprep.subr.mxu0 0.0
        %449 = vmatpush1.msra.mxu0 0.0
        %450 = vmatprep.subr.mxu0 0.0
        %451 = vmatpush1.msra.mxu0 0.0
        %452 = vmatprep.subr.mxu0 0.0
        %453 = vmatpush1.msra.mxu0 0.0
        %454 = vmatprep.subr.mxu0 0.0
        %455 = vmatpush1.msra.mxu0 0.0
        %456 = vmatprep.subr.mxu0 0.0
        %457 = vmatpush1.msra.mxu0 0.0
        %458 = vmatprep.subr.mxu0 0.0
        %459 = vmatpush1.msra.mxu0 0.0
        %460 = vmatprep.subr.mxu0 0.0
        %461 = vmatpush1.msra.mxu0 0.0
        %462 = vmatprep.subr.mxu0 0.0
        %463 = vmatpush1.msra.mxu0 0.0
        %464 = vmatprep.subr.mxu0 0.0
        %465 = vmatpush1.msra.mxu0 0.0
        %466 = vmatprep.subr.mxu0 0.0
        %467 = vmatpush1.msra.mxu0 0.0
        %468 = vmatprep.subr.mxu0 0.0
        %469 = vmatpush1.msra.mxu0 0.0
        %470 = vmatprep.subr.mxu0 0.0
        %471 = vmatpush1.msra.mxu0 0.0
        %472 = vmatprep.subr.mxu0 0.0
        %473 = vmatpush1.msra.mxu0 0.0
        %474 = vmatprep.subr.mxu0 0.0
        %475 = vmatpush1.msra.mxu0 0.0
        %476 = vmatprep.subr.mxu0 0.0
        %477 = vmatpush1.msra.mxu0 0.0
        %478 = vmatprep.subr.mxu0 0.0
        %479 = vmatpush1.msra.mxu0 0.0
        %480 = vmatprep.mubr.f32.mxu0 0.0
        %481 = vmatmul.mubr.f32.gmra.mrb[0].mxu0 %v414
        %v482 = vpop.f32.mrb[0].mxu0
        %v483 = vadd.f32 %v411, %v482
        %v484 = vpop.f32.mrb[0].mxu0
        %485 = vdwg.mxu0
        %v486 = vld [vmem:[%s6] sm:$0xff]
        %v487 = vld [vmem:[%s6 + $0x8] sm:$0xff]
        %v488 = vld [vmem:[%s7] sm:$0x1]
        %489 = vmatprep.subr.mxu0 0.0
        %490 = vmatpush1.msra.mxu0 %v486
        %491 = vmatprep.subr.mxu0 0.0
        %492 = vmatpush1.msra.mxu0 %v487
        %493 = vmatprep.subr.mxu0 0.0
        %494 = vmatpush1.msra.mxu0 0.0
        %495 = vmatprep.subr.mxu0 0.0
        %496 = vmatpush1.msra.mxu0 0.0
        %497 = vmatprep.subr.mxu0 0.0
        %498 = vmatpush1.msra.mxu0 0.0
        %499 = vmatprep.subr.mxu0 0.0
        %500 = vmatpush1.msra.mxu0 0.0
        %501 = vmatprep.subr.mxu0 0.0
        %502 = vmatpush1.msra.mxu0 0.0
        %503 = vmatprep.subr.mxu0 0.0
        %504 = vmatpush1.msra.mxu0 0.0
        %505 = vmatprep.subr.mxu0 0.0
        %506 = vmatpush1.msra.mxu0 0.0
        %507 = vmatprep.subr.mxu0 0.0
        %508 = vmatpush1.msra.mxu0 0.0
        %509 = vmatprep.subr.mxu0 0.0
        %510 = vmatpush1.msra.mxu0 0.0
        %511 = vmatprep.subr.mxu0 0.0
        %512 = vmatpush1.msra.mxu0 0.0
        %513 = vmatprep.subr.mxu0 0.0
        %514 = vmatpush1.msra.mxu0 0.0
        %515 = vmatprep.subr.mxu0 0.0
        %516 = vmatpush1.msra.mxu0 0.0
        %517 = vmatprep.subr.mxu0 0.0
        %518 = vmatpush1.msra.mxu0 0.0
        %519 = vmatprep.subr.mxu0 0.0
        %520 = vmatpush1.msra.mxu0 0.0
        %521 = vmatprep.subr.mxu0 0.0
        %522 = vmatpush1.msra.mxu0 0.0
        %523 = vmatprep.subr.mxu0 0.0
        %524 = vmatpush1.msra.mxu0 0.0
        %525 = vmatprep.subr.mxu0 0.0
        %526 = vmatpush1.msra.mxu0 0.0
        %527 = vmatprep.subr.mxu0 0.0
        %528 = vmatpush1.msra.mxu0 0.0
        %529 = vmatprep.subr.mxu0 0.0
        %530 = vmatpush1.msra.mxu0 0.0
        %531 = vmatprep.subr.mxu0 0.0
        %532 = vmatpush1.msra.mxu0 0.0
        %533 = vmatprep.subr.mxu0 0.0
        %534 = vmatpush1.msra.mxu0 0.0
        %535 = vmatprep.subr.mxu0 0.0
        %536 = vmatpush1.msra.mxu0 0.0
        %537 = vmatprep.subr.mxu0 0.0
        %538 = vmatpush1.msra.mxu0 0.0
        %539 = vmatprep.subr.mxu0 0.0
        %540 = vmatpush1.msra.mxu0 0.0
        %541 = vmatprep.subr.mxu0 0.0
        %542 = vmatpush1.msra.mxu0 0.0
        %543 = vmatprep.subr.mxu0 0.0
        %544 = vmatpush1.msra.mxu0 0.0
        %545 = vmatprep.subr.mxu0 0.0
        %546 = vmatpush1.msra.mxu0 0.0
        %547 = vmatprep.subr.mxu0 0.0
        %548 = vmatpush1.msra.mxu0 0.0
        %549 = vmatprep.subr.mxu0 0.0
        %550 = vmatpush1.msra.mxu0 0.0
        %551 = vmatprep.subr.mxu0 0.0
        %552 = vmatpush1.msra.mxu0 0.0
        %553 = vmatprep.mubr.f32.mxu0 0.0
        %554 = vmatmul.mubr.f32.gmra.mrb[0].mxu0 %v414
        %v555 = vpop.f32.mrb[0].mxu0
        %v556 = vadd.f32 %v488, %v555
        %v557 = vpop.f32.mrb[0].mxu0
        %558 = vdwg.mxu0
        %v559 = vadd.f32 %v483, 1.0
        %v560 = vlaneseq
        %v561 = vshrl.u32 %v560, 7
        %v562 = vsub.s32 0, %v561
        %v563 = vrot.slane %v559, %v562
        %v564 = vmul.f32 %v400, %v563
        %v565 = vlaneseq
        %v566 = vshrl.u32 %v565, 7
        %v567 = vsub.s32 0, %v566
        %v568 = vrot.slane %v556, %v567
        %v569 = vadd.f32 %v564, %v568
        %v570 = vld [vmem:[%s8] sm:$0xff]
        %v571 = vld [vmem:[%s8 + $0x8] sm:$0xff]
        %v572 = vld [vmem:[%s8 + $0x10] sm:$0xff]
        %v573 = vld [vmem:[%s8 + $0x18] sm:$0xff]
        %v574 = vld [vmem:[%s8 + $0x20] sm:$0xff]
        %v575 = vld [vmem:[%s8 + $0x28] sm:$0xff]
        %v576 = vld [vmem:[%s8 + $0x30] sm:$0xff]
        %v577 = vld [vmem:[%s8 + $0x38] sm:$0xff]
        %v578 = vld [vmem:[%s8 + $0x40] sm:$0xff]
        %v579 = vld [vmem:[%s8 + $0x48] sm:$0xff]
        %v580 = vld [vmem:[%s8 + $0x50] sm:$0xff]
        %v581 = vld [vmem:[%s8 + $0x58] sm:$0xff]
        %v583 = vsel %vm372, %v569, 0
        %585 = vmatprep.subr.mxu0 %v571
        %586 = vmatpush1.msra.mxu0 %v570
        %587 = vmatprep.subr.mxu0 %v574
        %588 = vmatpush1.msra.mxu0 %v573
        %589 = vmatprep.subr.mxu0 %v577
        %590 = vmatpush1.msra.mxu0 %v576
        %591 = vmatprep.subr.mxu0 %v580
        %592 = vmatpush1.msra.mxu0 %v579
        %593 = vmatprep.subr.mxu0 0.0
        %594 = vmatpush1.msra.mxu0 0.0
        %595 = vmatprep.subr.mxu0 0.0
        %596 = vmatpush1.msra.mxu0 0.0
        %597 = vmatprep.subr.mxu0 0.0
        %598 = vmatpush1.msra.mxu0 0.0
        %599 = vmatprep.subr.mxu0 0.0
        %600 = vmatpush1.msra.mxu0 0.0
        %601 = vmatprep.subr.mxu0 0.0
        %602 = vmatpush1.msra.mxu0 0.0
        %603 = vmatprep.subr.mxu0 0.0
        %604 = vmatpush1.msra.mxu0 0.0
        %605 = vmatprep.subr.mxu0 0.0
        %606 = vmatpush1.msra.mxu0 0.0
        %607 = vmatprep.subr.mxu0 0.0
        %608 = vmatpush1.msra.mxu0 0.0
        %609 = vmatprep.subr.mxu0 0.0
        %610 = vmatpush1.msra.mxu0 0.0
        %611 = vmatprep.subr.mxu0 0.0
        %612 = vmatpush1.msra.mxu0 0.0
        %613 = vmatprep.subr.mxu0 0.0
        %614 = vmatpush1.msra.mxu0 0.0
        %615 = vmatprep.subr.mxu0 0.0
        %616 = vmatpush1.msra.mxu0 0.0
        %617 = vmatprep.subr.mxu0 0.0
        %618 = vmatpush1.msra.mxu0 0.0
        %619 = vmatprep.subr.mxu0 0.0
        %620 = vmatpush1.msra.mxu0 0.0
        %621 = vmatprep.subr.mxu0 0.0
        %622 = vmatpush1.msra.mxu0 0.0
        %623 = vmatprep.subr.mxu0 0.0
        %624 = vmatpush1.msra.mxu0 0.0
        %625 = vmatprep.subr.mxu0 0.0
        %626 = vmatpush1.msra.mxu0 0.0
        %627 = vmatprep.subr.mxu0 0.0
        %628 = vmatpush1.msra.mxu0 0.0
        %629 = vmatprep.subr.mxu0 0.0
        %630 = vmatpush1.msra.mxu0 0.0
        %631 = vmatprep.subr.mxu0 0.0
        %632 = vmatpush1.msra.mxu0 0.0
        %633 = vmatprep.subr.mxu0 0.0
        %634 = vmatpush1.msra.mxu0 0.0
        %635 = vmatprep.subr.mxu0 0.0
        %636 = vmatpush1.msra.mxu0 0.0
        %637 = vmatprep.subr.mxu0 0.0
        %638 = vmatpush1.msra.mxu0 0.0
        %639 = vmatprep.subr.mxu0 0.0
        %640 = vmatpush1.msra.mxu0 0.0
        %641 = vmatprep.subr.mxu0 0.0
        %642 = vmatpush1.msra.mxu0 0.0
        %643 = vmatprep.subr.mxu0 0.0
        %644 = vmatpush1.msra.mxu0 0.0
        %645 = vmatprep.subr.mxu0 0.0
        %646 = vmatpush1.msra.mxu0 0.0
        %647 = vmatprep.subr.mxu0 0.0
        %648 = vmatpush1.msra.mxu0 0.0
        %649 = vmatprep.mubr.f32.mxu0 0.0
        %650 = vmatmul.mubr.f32.gmra.mrb[0].mxu0 %v583
        %v651 = vpop.f32.mrb[0].mxu0
        %v652 = vadd.f32 0.0, %v651
        %v653 = vpop.f32.mrb[0].mxu0
        %v654 = vadd.f32 0.0, %v653
        %655 = vdwg.mxu0
        %656 = vmatprep.subr.mxu0 0.0
        %657 = vmatpush1.msra.mxu0 %v572
        %658 = vmatprep.subr.mxu0 0.0
        %659 = vmatpush1.msra.mxu0 %v575
        %660 = vmatprep.subr.mxu0 0.0
        %661 = vmatpush1.msra.mxu0 %v578
        %662 = vmatprep.subr.mxu0 0.0
        %663 = vmatpush1.msra.mxu0 %v581
        %664 = vmatprep.subr.mxu0 0.0
        %665 = vmatpush1.msra.mxu0 0.0
        %666 = vmatprep.subr.mxu0 0.0
        %667 = vmatpush1.msra.mxu0 0.0
        %668 = vmatprep.subr.mxu0 0.0
        %669 = vmatpush1.msra.mxu0 0.0
        %670 = vmatprep.subr.mxu0 0.0
        %671 = vmatpush1.msra.mxu0 0.0
        %672 = vmatprep.subr.mxu0 0.0
        %673 = vmatpush1.msra.mxu0 0.0
        %674 = vmatprep.subr.mxu0 0.0
        %675 = vmatpush1.msra.mxu0 0.0
        %676 = vmatprep.subr.mxu0 0.0
        %677 = vmatpush1.msra.mxu0 0.0
        %678 = vmatprep.subr.mxu0 0.0
        %679 = vmatpush1.msra.mxu0 0.0
        %680 = vmatprep.subr.mxu0 0.0
        %681 = vmatpush1.msra.mxu0 0.0
        %682 = vmatprep.subr.mxu0 0.0
        %683 = vmatpush1.msra.mxu0 0.0
        %684 = vmatprep.subr.mxu0 0.0
        %685 = vmatpush1.msra.mxu0 0.0
        %686 = vmatprep.subr.mxu0 0.0
        %687 = vmatpush1.msra.mxu0 0.0
        %688 = vmatprep.subr.mxu0 0.0
        %689 = vmatpush1.msra.mxu0 0.0
        %690 = vmatprep.subr.mxu0 0.0
        %691 = vmatpush1.msra.mxu0 0.0
        %692 = vmatprep.subr.mxu0 0.0
        %693 = vmatpush1.msra.mxu0 0.0
        %694 = vmatprep.subr.mxu0 0.0
        %695 = vmatpush1.msra.mxu0 0.0
        %696 = vmatprep.subr.mxu0 0.0
        %697 = vmatpush1.msra.mxu0 0.0
        %698 = vmatprep.subr.mxu0 0.0
        %699 = vmatpush1.msra.mxu0 0.0
        %700 = vmatprep.subr.mxu0 0.0
        %701 = vmatpush1.msra.mxu0 0.0
        %702 = vmatprep.subr.mxu0 0.0
        %703 = vmatpush1.msra.mxu0 0.0
        %704 = vmatprep.subr.mxu0 0.0
        %705 = vmatpush1.msra.mxu0 0.0
        %706 = vmatprep.subr.mxu0 0.0
        %707 = vmatpush1.msra.mxu0 0.0
        %708 = vmatprep.subr.mxu0 0.0
        %709 = vmatpush1.msra.mxu0 0.0
        %710 = vmatprep.subr.mxu0 0.0
        %711 = vmatpush1.msra.mxu0 0.0
        %712 = vmatprep.subr.mxu0 0.0
        %713 = vmatpush1.msra.mxu0 0.0
        %714 = vmatprep.subr.mxu0 0.0
        %715 = vmatpush1.msra.mxu0 0.0
        %716 = vmatprep.subr.mxu0 0.0
        %717 = vmatpush1.msra.mxu0 0.0
        %718 = vmatprep.subr.mxu0 0.0
        %719 = vmatpush1.msra.mxu0 0.0
        %720 = vmatprep.mubr.f32.mxu0 0.0
        %721 = vmatmul.mubr.f32.gmra.mrb[0].mxu0 %v583
        %v722 = vpop.f32.mrb[0].mxu0
        %v723 = vadd.f32 0.0, %v722
        %v724 = vpop.f32.mrb[0].mxu0
        %725 = vdwg.mxu0
        %v726 = vmul.f32 %v652, 0.17677669
        %v728 = vsel %vm372, %v726, 0
        %v731 = vsel %vm372, %v654, 0
        %733 = vmatprep.subr.mxu0 0.0
        %734 = vmatpush1.xpose.msra.mxu0 %v731
        %735 = vmatprep.subr.mxu0 0.0
        %736 = vmatpush1.xpose.msra.mxu0 0.0
        %737 = vmatprep.subr.mxu0 0.0
        %738 = vmatpush1.xpose.msra.mxu0 0.0
        %739 = vmatprep.subr.mxu0 0.0
        %740 = vmatpush1.xpose.msra.mxu0 0.0
        %741 = vmatprep.subr.mxu0 0.0
        %742 = vmatpush1.xpose.msra.mxu0 0.0
        %743 = vmatprep.subr.mxu0 0.0
        %744 = vmatpush1.xpose.msra.mxu0 0.0
        %745 = vmatprep.subr.mxu0 0.0
        %746 = vmatpush1.xpose.msra.mxu0 0.0
        %747 = vmatprep.subr.mxu0 0.0
        %748 = vmatpush1.xpose.msra.mxu0 0.0
        %749 = vmatprep.subr.mxu0 0.0
        %750 = vmatpush1.xpose.msra.mxu0 0.0
        %751 = vmatprep.subr.mxu0 0.0
        %752 = vmatpush1.xpose.msra.mxu0 0.0
        %753 = vmatprep.subr.mxu0 0.0
        %754 = vmatpush1.xpose.msra.mxu0 0.0
        %755 = vmatprep.subr.mxu0 0.0
        %756 = vmatpush1.xpose.msra.mxu0 0.0
        %757 = vmatprep.subr.mxu0 0.0
        %758 = vmatpush1.xpose.msra.mxu0 0.0
        %759 = vmatprep.subr.mxu0 0.0
        %760 = vmatpush1.xpose.msra.mxu0 0.0
        %761 = vmatprep.subr.mxu0 0.0
        %762 = vmatpush1.xpose.msra.mxu0 0.0
        %763 = vmatprep.subr.mxu0 0.0
        %764 = vmatpush1.xpose.msra.mxu0 0.0
        %765 = vmatprep.subr.mxu0 0.0
        %766 = vmatpush1.xpose.msra.mxu0 0.0
        %767 = vmatprep.subr.mxu0 0.0
        %768 = vmatpush1.xpose.msra.mxu0 0.0
        %769 = vmatprep.subr.mxu0 0.0
        %770 = vmatpush1.xpose.msra.mxu0 0.0
        %771 = vmatprep.subr.mxu0 0.0
        %772 = vmatpush1.xpose.msra.mxu0 0.0
        %773 = vmatprep.subr.mxu0 0.0
        %774 = vmatpush1.xpose.msra.mxu0 0.0
        %775 = vmatprep.subr.mxu0 0.0
        %776 = vmatpush1.xpose.msra.mxu0 0.0
        %777 = vmatprep.subr.mxu0 0.0
        %778 = vmatpush1.xpose.msra.mxu0 0.0
        %779 = vmatprep.subr.mxu0 0.0
        %780 = vmatpush1.xpose.msra.mxu0 0.0
        %781 = vmatprep.subr.mxu0 0.0
        %782 = vmatpush1.xpose.msra.mxu0 0.0
        %783 = vmatprep.subr.mxu0 0.0
        %784 = vmatpush1.xpose.msra.mxu0 0.0
        %785 = vmatprep.subr.mxu0 0.0
        %786 = vmatpush1.xpose.msra.mxu0 0.0
        %787 = vmatprep.subr.mxu0 0.0
        %788 = vmatpush1.xpose.msra.mxu0 0.0
        %789 = vmatprep.subr.mxu0 0.0
        %790 = vmatpush1.xpose.msra.mxu0 0.0
        %791 = vmatprep.subr.mxu0 0.0
        %792 = vmatpush1.xpose.msra.mxu0 0.0
        %793 = vmatprep.subr.mxu0 0.0
        %794 = vmatpush1.xpose.msra.mxu0 0.0
        %795 = vmatprep.subr.mxu0 0.0
        %796 = vmatpush1.xpose.msra.mxu0 0.0
        %797 = vmatprep.mubr.f32.mxu0 0.0
        %798 = vmatmul.mubr.f32.gmra.mrb[0].mxu0 %v728
        %v799 = vpop.f32.mrb[0].mxu0
        %v800 = vadd.f32 0.0, %v799
        %v801 = vpop.f32.mrb[0].mxu0
        %802 = vdwg.mxu0
        %vm803 = vcmask 64512
        %v804 = vsel %vm803, %v800, -inf
        %805 = vmax.xlane.f32.xlu0 %v804
        %v806 = vpop.xlane.xlu0 %805
        %v807 = vsub.f32 %v800, %v806
        %v808 = vmul.f32 %v807, 1.442695
        %v809 = vpow.pop %v808
        %v810 = vsel %vm803, %v809, 0.0
        %811 = vadd.xlane.f32.xlu0 %v810
        %v812 = vpop.xlane.xlu0 %811
        %v813 = vrcp.pop %v812
        %v814 = vmul.f32 %v809, %v813
        %v816 = vsel %vm803, %v814, 0
        %818 = vmatprep.subr.mxu0 0.0
        %819 = vmatpush1.msra.mxu0 %v723
        %820 = vmatprep.subr.mxu0 0.0
        %821 = vmatpush1.msra.mxu0 0.0
        %822 = vmatprep.subr.mxu0 0.0
        %823 = vmatpush1.msra.mxu0 0.0
        %824 = vmatprep.subr.mxu0 0.0
        %825 = vmatpush1.msra.mxu0 0.0
        %826 = vmatprep.subr.mxu0 0.0
        %827 = vmatpush1.msra.mxu0 0.0
        %828 = vmatprep.subr.mxu0 0.0
        %829 = vmatpush1.msra.mxu0 0.0
        %830 = vmatprep.subr.mxu0 0.0
        %831 = vmatpush1.msra.mxu0 0.0
        %832 = vmatprep.subr.mxu0 0.0
        %833 = vmatpush1.msra.mxu0 0.0
        %834 = vmatprep.subr.mxu0 0.0
        %835 = vmatpush1.msra.mxu0 0.0
        %836 = vmatprep.subr.mxu0 0.0
        %837 = vmatpush1.msra.mxu0 0.0
        %838 = vmatprep.subr.mxu0 0.0
        %839 = vmatpush1.msra.mxu0 0.0
        %840 = vmatprep.subr.mxu0 0.0
        %841 = vmatpush1.msra.mxu0 0.0
        %842 = vmatprep.subr.mxu0 0.0
        %843 = vmatpush1.msra.mxu0 0.0
        %844 = vmatprep.subr.mxu0 0.0
        %845 = vmatpush1.msra.mxu0 0.0
        %846 = vmatprep.subr.mxu0 0.0
        %847 = vmatpush1.msra.mxu0 0.0
        %848 = vmatprep.subr.mxu0 0.0
        %849 = vmatpush1.msra.mxu0 0.0
        %850 = vmatprep.subr.mxu0 0.0
        %851 = vmatpush1.msra.mxu0 0.0
        %852 = vmatprep.subr.mxu0 0.0
        %853 = vmatpush1.msra.mxu0 0.0
        %854 = vmatprep.subr.mxu0 0.0
        %855 = vmatpush1.msra.mxu0 0.0
        %856 = vmatprep.subr.mxu0 0.0
        %857 = vmatpush1.msra.mxu0 0.0
        %858 = vmatprep.subr.mxu0 0.0
        %859 = vmatpush1.msra.mxu0 0.0
        %860 = vmatprep.subr.mxu0 0.0
        %861 = vmatpush1.msra.mxu0 0.0
        %862 = vmatprep.subr.mxu0 0.0
        %863 = vmatpush1.msra.mxu0 0.0
        %864 = vmatprep.subr.mxu0 0.0
        %865 = vmatpush1.msra.mxu0 0.0
        %866 = vmatprep.subr.mxu0 0.0
        %867 = vmatpush1.msra.mxu0 0.0
        %868 = vmatprep.subr.mxu0 0.0
        %869 = vmatpush1.msra.mxu0 0.0
        %870 = vmatprep.subr.mxu0 0.0
        %871 = vmatpush1.msra.mxu0 0.0
        %872 = vmatprep.subr.mxu0 0.0
        %873 = vmatpush1.msra.mxu0 0.0
        %874 = vmatprep.subr.mxu0 0.0
        %875 = vmatpush1.msra.mxu0 0.0
        %876 = vmatprep.subr.mxu0 0.0
        %877 = vmatpush1.msra.mxu0 0.0
        %878 = vmatprep.subr.mxu0 0.0
        %879 = vmatpush1.msra.mxu0 0.0
        %880 = vmatprep.subr.mxu0 0.0
        %881 = vmatpush1.msra.mxu0 0.0
        %882 = vmatprep.mubr.f32.mxu0 0.0
        %883 = vmatmul.mubr.f32.gmra.mrb[0].mxu0 %v816
        %v884 = vpop.f32.mrb[0].mxu0
        %v885 = vadd.f32 0.0, %v884
        %v886 = vpop.f32.mrb[0].mxu0
        %887 = vdwg.mxu0
        %888 = vrot.lane.b32.xlu0 %v726, 96
        %v889 = vpop.permute.xlu0 %888
        %890 = vrot.lane.b32.xlu0 %v654, 96
        %v891 = vpop.permute.xlu0 %890
        %v892 = vsel %vm372, %v889, 0
        %v894 = vsel %vm372, %v891, 0
        %896 = vmatprep.subr.mxu0 0.0
        %897 = vmatpush1.xpose.msra.mxu0 %v894
        %898 = vmatprep.subr.mxu0 0.0
        %899 = vmatpush1.xpose.msra.mxu0 0.0
        %900 = vmatprep.subr.mxu0 0.0
        %901 = vmatpush1.xpose.msra.mxu0 0.0
        %902 = vmatprep.subr.mxu0 0.0
        %903 = vmatpush1.xpose.msra.mxu0 0.0
        %904 = vmatprep.subr.mxu0 0.0
        %905 = vmatpush1.xpose.msra.mxu0 0.0
        %906 = vmatprep.subr.mxu0 0.0
        %907 = vmatpush1.xpose.msra.mxu0 0.0
        %908 = vmatprep.subr.mxu0 0.0
        %909 = vmatpush1.xpose.msra.mxu0 0.0
        %910 = vmatprep.subr.mxu0 0.0
        %911 = vmatpush1.xpose.msra.mxu0 0.0
        %912 = vmatprep.subr.mxu0 0.0
        %913 = vmatpush1.xpose.msra.mxu0 0.0
        %914 = vmatprep.subr.mxu0 0.0
        %915 = vmatpush1.xpose.msra.mxu0 0.0
        %916 = vmatprep.subr.mxu0 0.0
        %917 = vmatpush1.xpose.msra.mxu0 0.0
        %918 = vmatprep.subr.mxu0 0.0
        %919 = vmatpush1.xpose.msra.mxu0 0.0
        %920 = vmatprep.subr.mxu0 0.0
        %921 = vmatpush1.xpose.msra.mxu0 0.0
        %922 = vmatprep.subr.mxu0 0.0
        %923 = vmatpush1.xpose.msra.mxu0 0.0
        %924 = vmatprep.subr.mxu0 0.0
        %925 = vmatpush1.xpose.msra.mxu0 0.0
        %926 = vmatprep.subr.mxu0 0.0
        %927 = vmatpush1.xpose.msra.mxu0 0.0
        %928 = vmatprep.subr.mxu0 0.0
        %929 = vmatpush1.xpose.msra.mxu0 0.0
        %930 = vmatprep.subr.mxu0 0.0
        %931 = vmatpush1.xpose.msra.mxu0 0.0
        %932 = vmatprep.subr.mxu0 0.0
        %933 = vmatpush1.xpose.msra.mxu0 0.0
        %934 = vmatprep.subr.mxu0 0.0
        %935 = vmatpush1.xpose.msra.mxu0 0.0
        %936 = vmatprep.subr.mxu0 0.0
        %937 = vmatpush1.xpose.msra.mxu0 0.0
        %938 = vmatprep.subr.mxu0 0.0
        %939 = vmatpush1.xpose.msra.mxu0 0.0
        %940 = vmatprep.subr.mxu0 0.0
        %941 = vmatpush1.xpose.msra.mxu0 0.0
        %942 = vmatprep.subr.mxu0 0.0
        %943 = vmatpush1.xpose.msra.mxu0 0.0
        %944 = vmatprep.subr.mxu0 0.0
        %945 = vmatpush1.xpose.msra.mxu0 0.0
        %946 = vmatprep.subr.mxu0 0.0
        %947 = vmatpush1.xpose.msra.mxu0 0.0
        %948 = vmatprep.subr.mxu0 0.0
        %949 = vmatpush1.xpose.msra.mxu0 0.0
        %950 = vmatprep.subr.mxu0 0.0
        %951 = vmatpush1.xpose.msra.mxu0 0.0
        %952 = vmatprep.subr.mxu0 0.0
        %953 = vmatpush1.xpose.msra.mxu0 0.0
        %954 = vmatprep.subr.mxu0 0.0
        %955 = vmatpush1.xpose.msra.mxu0 0.0
        %956 = vmatprep.subr.mxu0 0.0
        %957 = vmatpush1.xpose.msra.mxu0 0.0
        %958 = vmatprep.subr.mxu0 0.0
        %959 = vmatpush1.xpose.msra.mxu0 0.0
        %960 = vmatprep.mubr.f32.mxu0 0.0
        %961 = vmatmul.mubr.f32.gmra.mrb[0].mxu0 %v892
        %v962 = vpop.f32.mrb[0].mxu0
        %v963 = vadd.f32 0.0, %v962
        %v964 = vpop.f32.mrb[0].mxu0
        %965 = vdwg.mxu0
        %v966 = vsel %vm803, %v963, -inf
        %967 = vmax.xlane.f32.xlu0 %v966
        %v968 = vpop.xlane.xlu0 %967
        %v969 = vsub.f32 %v963, %v968
        %v970 = vmul.f32 %v969, 1.442695
        %v971 = vpow.pop %v970
        %v972 = vsel %vm803, %v971, 0.0
        %973 = vadd.xlane.f32.xlu0 %v972
        %v974 = vpop.xlane.xlu0 %973
        %v975 = vrcp.pop %v974
        %v976 = vmul.f32 %v971, %v975
        %978 = vrot.lane.b32.xlu0 %v723, 96
        %v979 = vpop.permute.xlu0 %978
        %v982 = vsel %vm803, %v976, 0
        %984 = vmatprep.subr.mxu0 0.0
        %985 = vmatpush1.msra.mxu0 %v979
        %986 = vmatprep.subr.mxu0 0.0
        %987 = vmatpush1.msra.mxu0 0.0
        %988 = vmatprep.subr.mxu0 0.0
        %989 = vmatpush1.msra.mxu0 0.0
        %990 = vmatprep.subr.mxu0 0.0
        %991 = vmatpush1.msra.mxu0 0.0
        %992 = vmatprep.subr.mxu0 0.0
        %993 = vmatpush1.msra.mxu0 0.0
        %994 = vmatprep.subr.mxu0 0.0
        %995 = vmatpush1.msra.mxu0 0.0
        %996 = vmatprep.subr.mxu0 0.0
        %997 = vmatpush1.msra.mxu0 0.0
        %998 = vmatprep.subr.mxu0 0.0
        %999 = vmatpush1.msra.mxu0 0.0
        %1000 = vmatprep.subr.mxu0 0.0
        %1001 = vmatpush1.msra.mxu0 0.0
        %1002 = vmatprep.subr.mxu0 0.0
        %1003 = vmatpush1.msra.mxu0 0.0
        %1004 = vmatprep.subr.mxu0 0.0
        %1005 = vmatpush1.msra.mxu0 0.0
        %1006 = vmatprep.subr.mxu0 0.0
        %1007 = vmatpush1.msra.mxu0 0.0
        %1008 = vmatprep.subr.mxu0 0.0
        %1009 = vmatpush1.msra.mxu0 0.0
        %1010 = vmatprep.subr.mxu0 0.0
        %1011 = vmatpush1.msra.mxu0 0.0
        %1012 = vmatprep.subr.mxu0 0.0
        %1013 = vmatpush1.msra.mxu0 0.0
        %1014 = vmatprep.subr.mxu0 0.0
        %1015 = vmatpush1.msra.mxu0 0.0
        %1016 = vmatprep.subr.mxu0 0.0
        %1017 = vmatpush1.msra.mxu0 0.0
        %1018 = vmatprep.subr.mxu0 0.0
        %1019 = vmatpush1.msra.mxu0 0.0
        %1020 = vmatprep.subr.mxu0 0.0
        %1021 = vmatpush1.msra.mxu0 0.0
        %1022 = vmatprep.subr.mxu0 0.0
        %1023 = vmatpush1.msra.mxu0 0.0
        %1024 = vmatprep.subr.mxu0 0.0
        %1025 = vmatpush1.msra.mxu0 0.0
        %1026 = vmatprep.subr.mxu0 0.0
        %1027 = vmatpush1.msra.mxu0 0.0
        %1028 = vmatprep.subr.mxu0 0.0
        %1029 = vmatpush1.msra.mxu0 0.0
        %1030 = vmatprep.subr.mxu0 0.0
        %1031 = vmatpush1.msra.mxu0 0.0
        %1032 = vmatprep.subr.mxu0 0.0
        %1033 = vmatpush1.msra.mxu0 0.0
        %1034 = vmatprep.subr.mxu0 0.0
        %1035 = vmatpush1.msra.mxu0 0.0
        %1036 = vmatprep.subr.mxu0 0.0
        %1037 = vmatpush1.msra.mxu0 0.0
        %1038 = vmatprep.subr.mxu0 0.0
        %1039 = vmatpush1.msra.mxu0 0.0
        %1040 = vmatprep.subr.mxu0 0.0
        %1041 = vmatpush1.msra.mxu0 0.0
        %1042 = vmatprep.subr.mxu0 0.0
        %1043 = vmatpush1.msra.mxu0 0.0
        %1044 = vmatprep.subr.mxu0 0.0
        %1045 = vmatpush1.msra.mxu0 0.0
        %1046 = vmatprep.subr.mxu0 0.0
        %1047 = vmatpush1.msra.mxu0 0.0
        %1048 = vmatprep.mubr.f32.mxu0 0.0
        %1049 = vmatmul.mubr.f32.gmra.mrb[0].mxu0 %v982
        %v1050 = vpop.f32.mrb[0].mxu0
        %v1051 = vadd.f32 0.0, %v1050
        %v1052 = vpop.f32.mrb[0].mxu0
        %1053 = vdwg.mxu0
        %1054 = vrot.lane.b32.xlu0 %v726, 64
        %v1055 = vpop.permute.xlu0 %1054
        %1056 = vrot.lane.b32.xlu0 %v654, 64
        %v1057 = vpop.permute.xlu0 %1056
        %v1058 = vsel %vm372, %v1055, 0
        %v1060 = vsel %vm372, %v1057, 0
        %1062 = vmatprep.subr.mxu0 0.0
        %1063 = vmatpush1.xpose.msra.mxu0 %v1060
        %1064 = vmatprep.subr.mxu0 0.0
        %1065 = vmatpush1.xpose.msra.mxu0 0.0
        %1066 = vmatprep.subr.mxu0 0.0
        %1067 = vmatpush1.xpose.msra.mxu0 0.0
        %1068 = vmatprep.subr.mxu0 0.0
        %1069 = vmatpush1.xpose.msra.mxu0 0.0
        %1070 = vmatprep.subr.mxu0 0.0
        %1071 = vmatpush1.xpose.msra.mxu0 0.0
        %1072 = vmatprep.subr.mxu0 0.0
        %1073 = vmatpush1.xpose.msra.mxu0 0.0
        %1074 = vmatprep.subr.mxu0 0.0
        %1075 = vmatpush1.xpose.msra.mxu0 0.0
        %1076 = vmatprep.subr.mxu0 0.0
        %1077 = vmatpush1.xpose.msra.mxu0 0.0
        %1078 = vmatprep.subr.mxu0 0.0
        %1079 = vmatpush1.xpose.msra.mxu0 0.0
        %1080 = vmatprep.subr.mxu0 0.0
        %1081 = vmatpush1.xpose.msra.mxu0 0.0
        %1082 = vmatprep.subr.mxu0 0.0
        %1083 = vmatpush1.xpose.msra.mxu0 0.0
        %1084 = vmatprep.subr.mxu0 0.0
        %1085 = vmatpush1.xpose.msra.mxu0 0.0
        %1086 = vmatprep.subr.mxu0 0.0
        %1087 = vmatpush1.xpose.msra.mxu0 0.0
        %1088 = vmatprep.subr.mxu0 0.0
        %1089 = vmatpush1.xpose.msra.mxu0 0.0
        %1090 = vmatprep.subr.mxu0 0.0
        %1091 = vmatpush1.xpose.msra.mxu0 0.0
        %1092 = vmatprep.subr.mxu0 0.0
        %1093 = vmatpush1.xpose.msra.mxu0 0.0
        %1094 = vmatprep.subr.mxu0 0.0
        %1095 = vmatpush1.xpose.msra.mxu0 0.0
        %1096 = vmatprep.subr.mxu0 0.0
        %1097 = vmatpush1.xpose.msra.mxu0 0.0
        %1098 = vmatprep.subr.mxu0 0.0
        %1099 = vmatpush1.xpose.msra.mxu0 0.0
        %1100 = vmatprep.subr.mxu0 0.0
        %1101 = vmatpush1.xpose.msra.mxu0 0.0
        %1102 = vmatprep.subr.mxu0 0.0
        %1103 = vmatpush1.xpose.msra.mxu0 0.0
        %1104 = vmatprep.subr.mxu0 0.0
        %1105 = vmatpush1.xpose.msra.mxu0 0.0
        %1106 = vmatprep.subr.mxu0 0.0
        %1107 = vmatpush1.xpose.msra.mxu0 0.0
        %1108 = vmatprep.subr.mxu0 0.0
        %1109 = vmatpush1.xpose.msra.mxu0 0.0
        %1110 = vmatprep.subr.mxu0 0.0
        %1111 = vmatpush1.xpose.msra.mxu0 0.0
        %1112 = vmatprep.subr.mxu0 0.0
        %1113 = vmatpush1.xpose.msra.mxu0 0.0
        %1114 = vmatprep.subr.mxu0 0.0
        %1115 = vmatpush1.xpose.msra.mxu0 0.0
        %1116 = vmatprep.subr.mxu0 0.0
        %1117 = vmatpush1.xpose.msra.mxu0 0.0
        %1118 = vmatprep.subr.mxu0 0.0
        %1119 = vmatpush1.xpose.msra.mxu0 0.0
        %1120 = vmatprep.subr.mxu0 0.0
        %1121 = vmatpush1.xpose.msra.mxu0 0.0
        %1122 = vmatprep.subr.mxu0 0.0
        %1123 = vmatpush1.xpose.msra.mxu0 0.0
        %1124 = vmatprep.subr.mxu0 0.0
        %1125 = vmatpush1.xpose.msra.mxu0 0.0
        %1126 = vmatprep.mubr.f32.mxu0 0.0
        %1127 = vmatmul.mubr.f32.gmra.mrb[0].mxu0 %v1058
        %v1128 = vpop.f32.mrb[0].mxu0
        %v1129 = vadd.f32 0.0, %v1128
        %v1130 = vpop.f32.mrb[0].mxu0
        %1131 = vdwg.mxu0
        %v1132 = vsel %vm803, %v1129, -inf
        %1133 = vmax.xlane.f32.xlu0 %v1132
        %v1134 = vpop.xlane.xlu0 %1133
        %v1135 = vsub.f32 %v1129, %v1134
        %v1136 = vmul.f32 %v1135, 1.442695
        %v1137 = vpow.pop %v1136
        %v1138 = vsel %vm803, %v1137, 0.0
        %1139 = vadd.xlane.f32.xlu0 %v1138
        %v1140 = vpop.xlane.xlu0 %1139
        %v1141 = vrcp.pop %v1140
        %v1142 = vmul.f32 %v1137, %v1141
        %1143 = vrot.lane.b32.xlu0 %v723, 64
        %v1144 = vpop.permute.xlu0 %1143
        %v1147 = vsel %vm803, %v1142, 0
        %1149 = vmatprep.subr.mxu0 0.0
        %1150 = vmatpush1.msra.mxu0 %v1144
        %1151 = vmatprep.subr.mxu0 0.0
        %1152 = vmatpush1.msra.mxu0 0.0
        %1153 = vmatprep.subr.mxu0 0.0
        %1154 = vmatpush1.msra.mxu0 0.0
        %1155 = vmatprep.subr.mxu0 0.0
        %1156 = vmatpush1.msra.mxu0 0.0
        %1157 = vmatprep.subr.mxu0 0.0
        %1158 = vmatpush1.msra.mxu0 0.0
        %1159 = vmatprep.subr.mxu0 0.0
        %1160 = vmatpush1.msra.mxu0 0.0
        %1161 = vmatprep.subr.mxu0 0.0
        %1162 = vmatpush1.msra.mxu0 0.0
        %1163 = vmatprep.subr.mxu0 0.0
        %1164 = vmatpush1.msra.mxu0 0.0
        %1165 = vmatprep.subr.mxu0 0.0
        %1166 = vmatpush1.msra.mxu0 0.0
        %1167 = vmatprep.subr.mxu0 0.0
        %1168 = vmatpush1.msra.mxu0 0.0
        %1169 = vmatprep.subr.mxu0 0.0
        %1170 = vmatpush1.msra.mxu0 0.0
        %1171 = vmatprep.subr.mxu0 0.0
        %1172 = vmatpush1.msra.mxu0 0.0
        %1173 = vmatprep.subr.mxu0 0.0
        %1174 = vmatpush1.msra.mxu0 0.0
        %1175 = vmatprep.subr.mxu0 0.0
        %1176 = vmatpush1.msra.mxu0 0.0
        %1177 = vmatprep.subr.mxu0 0.0
        %1178 = vmatpush1.msra.mxu0 0.0
        %1179 = vmatprep.subr.mxu0 0.0
        %1180 = vmatpush1.msra.mxu0 0.0
        %1181 = vmatprep.subr.mxu0 0.0
        %1182 = vmatpush1.msra.mxu0 0.0
        %1183 = vmatprep.subr.mxu0 0.0
        %1184 = vmatpush1.msra.mxu0 0.0
        %1185 = vmatprep.subr.mxu0 0.0
        %1186 = vmatpush1.msra.mxu0 0.0
        %1187 = vmatprep.subr.mxu0 0.0
        %1188 = vmatpush1.msra.mxu0 0.0
        %1189 = vmatprep.subr.mxu0 0.0
        %1190 = vmatpush1.msra.mxu0 0.0
        %1191 = vmatprep.subr.mxu0 0.0
        %1192 = vmatpush1.msra.mxu0 0.0
        %1193 = vmatprep.subr.mxu0 0.0
        %1194 = vmatpush1.msra.mxu0 0.0
        %1195 = vmatprep.subr.mxu0 0.0
        %1196 = vmatpush1.msra.mxu0 0.0
        %1197 = vmatprep.subr.mxu0 0.0
        %1198 = vmatpush1.msra.mxu0 0.0
        %1199 = vmatprep.subr.mxu0 0.0
        %1200 = vmatpush1.msra.mxu0 0.0
        %1201 = vmatprep.subr.mxu0 0.0
        %1202 = vmatpush1.msra.mxu0 0.0
        %1203 = vmatprep.subr.mxu0 0.0
        %1204 = vmatpush1.msra.mxu0 0.0
        %1205 = vmatprep.subr.mxu0 0.0
        %1206 = vmatpush1.msra.mxu0 0.0
        %1207 = vmatprep.subr.mxu0 0.0
        %1208 = vmatpush1.msra.mxu0 0.0
        %1209 = vmatprep.subr.mxu0 0.0
        %1210 = vmatpush1.msra.mxu0 0.0
        %1211 = vmatprep.subr.mxu0 0.0
        %1212 = vmatpush1.msra.mxu0 0.0
        %1213 = vmatprep.mubr.f32.mxu0 0.0
        %1214 = vmatmul.mubr.f32.gmra.mrb[0].mxu0 %v1147
        %v1215 = vpop.f32.mrb[0].mxu0
        %v1216 = vadd.f32 0.0, %v1215
        %v1217 = vpop.f32.mrb[0].mxu0
        %1218 = vdwg.mxu0
        %1219 = vrot.lane.b32.xlu0 %v726, 32
        %v1220 = vpop.permute.xlu0 %1219
        %1221 = vrot.lane.b32.xlu0 %v654, 32
        %v1222 = vpop.permute.xlu0 %1221
        %v1223 = vsel %vm372, %v1220, 0
        %v1225 = vsel %vm372, %v1222, 0
        %1227 = vmatprep.subr.mxu0 0.0
        %1228 = vmatpush1.xpose.msra.mxu0 %v1225
        %1229 = vmatprep.subr.mxu0 0.0
        %1230 = vmatpush1.xpose.msra.mxu0 0.0
        %1231 = vmatprep.subr.mxu0 0.0
        %1232 = vmatpush1.xpose.msra.mxu0 0.0
        %1233 = vmatprep.subr.mxu0 0.0
        %1234 = vmatpush1.xpose.msra.mxu0 0.0
        %1235 = vmatprep.subr.mxu0 0.0
        %1236 = vmatpush1.xpose.msra.mxu0 0.0
        %1237 = vmatprep.subr.mxu0 0.0
        %1238 = vmatpush1.xpose.msra.mxu0 0.0
        %1239 = vmatprep.subr.mxu0 0.0
        %1240 = vmatpush1.xpose.msra.mxu0 0.0
        %1241 = vmatprep.subr.mxu0 0.0
        %1242 = vmatpush1.xpose.msra.mxu0 0.0
        %1243 = vmatprep.subr.mxu0 0.0
        %1244 = vmatpush1.xpose.msra.mxu0 0.0
        %1245 = vmatprep.subr.mxu0 0.0
        %1246 = vmatpush1.xpose.msra.mxu0 0.0
        %1247 = vmatprep.subr.mxu0 0.0
        %1248 = vmatpush1.xpose.msra.mxu0 0.0
        %1249 = vmatprep.subr.mxu0 0.0
        %1250 = vmatpush1.xpose.msra.mxu0 0.0
        %1251 = vmatprep.subr.mxu0 0.0
        %1252 = vmatpush1.xpose.msra.mxu0 0.0
        %1253 = vmatprep.subr.mxu0 0.0
        %1254 = vmatpush1.xpose.msra.mxu0 0.0
        %1255 = vmatprep.subr.mxu0 0.0
        %1256 = vmatpush1.xpose.msra.mxu0 0.0
        %1257 = vmatprep.subr.mxu0 0.0
        %1258 = vmatpush1.xpose.msra.mxu0 0.0
        %1259 = vmatprep.subr.mxu0 0.0
        %1260 = vmatpush1.xpose.msra.mxu0 0.0
        %1261 = vmatprep.subr.mxu0 0.0
        %1262 = vmatpush1.xpose.msra.mxu0 0.0
        %1263 = vmatprep.subr.mxu0 0.0
        %1264 = vmatpush1.xpose.msra.mxu0 0.0
        %1265 = vmatprep.subr.mxu0 0.0
        %1266 = vmatpush1.xpose.msra.mxu0 0.0
        %1267 = vmatprep.subr.mxu0 0.0
        %1268 = vmatpush1.xpose.msra.mxu0 0.0
        %1269 = vmatprep.subr.mxu0 0.0
        %1270 = vmatpush1.xpose.msra.mxu0 0.0
        %1271 = vmatprep.subr.mxu0 0.0
        %1272 = vmatpush1.xpose.msra.mxu0 0.0
        %1273 = vmatprep.subr.mxu0 0.0
        %1274 = vmatpush1.xpose.msra.mxu0 0.0
        %1275 = vmatprep.subr.mxu0 0.0
        %1276 = vmatpush1.xpose.msra.mxu0 0.0
        %1277 = vmatprep.subr.mxu0 0.0
        %1278 = vmatpush1.xpose.msra.mxu0 0.0
        %1279 = vmatprep.subr.mxu0 0.0
        %1280 = vmatpush1.xpose.msra.mxu0 0.0
        %1281 = vmatprep.subr.mxu0 0.0
        %1282 = vmatpush1.xpose.msra.mxu0 0.0
        %1283 = vmatprep.subr.mxu0 0.0
        %1284 = vmatpush1.xpose.msra.mxu0 0.0
        %1285 = vmatprep.subr.mxu0 0.0
        %1286 = vmatpush1.xpose.msra.mxu0 0.0
        %1287 = vmatprep.subr.mxu0 0.0
        %1288 = vmatpush1.xpose.msra.mxu0 0.0
        %1289 = vmatprep.subr.mxu0 0.0
        %1290 = vmatpush1.xpose.msra.mxu0 0.0
        %1291 = vmatprep.mubr.f32.mxu0 0.0
        %1292 = vmatmul.mubr.f32.gmra.mrb[0].mxu0 %v1223
        %v1293 = vpop.f32.mrb[0].mxu0
        %v1294 = vadd.f32 0.0, %v1293
        %v1295 = vpop.f32.mrb[0].mxu0
        %1296 = vdwg.mxu0
        %v1297 = vsel %vm803, %v1294, -inf
        %1298 = vmax.xlane.f32.xlu0 %v1297
        %v1299 = vpop.xlane.xlu0 %1298
        %v1300 = vsub.f32 %v1294, %v1299
        %v1301 = vmul.f32 %v1300, 1.442695
        %v1302 = vpow.pop %v1301
        %v1303 = vsel %vm803, %v1302, 0.0
        %1304 = vadd.xlane.f32.xlu0 %v1303
        %v1305 = vpop.xlane.xlu0 %1304
        %v1306 = vrcp.pop %v1305
        %v1307 = vmul.f32 %v1302, %v1306
        %1308 = vrot.lane.b32.xlu0 %v723, 32
        %v1309 = vpop.permute.xlu0 %1308
        %v1312 = vsel %vm803, %v1307, 0
        %1314 = vmatprep.subr.mxu0 0.0
        %1315 = vmatpush1.msra.mxu0 %v1309
        %1316 = vmatprep.subr.mxu0 0.0
        %1317 = vmatpush1.msra.mxu0 0.0
        %1318 = vmatprep.subr.mxu0 0.0
        %1319 = vmatpush1.msra.mxu0 0.0
        %1320 = vmatprep.subr.mxu0 0.0
        %1321 = vmatpush1.msra.mxu0 0.0
        %1322 = vmatprep.subr.mxu0 0.0
        %1323 = vmatpush1.msra.mxu0 0.0
        %1324 = vmatprep.subr.mxu0 0.0
        %1325 = vmatpush1.msra.mxu0 0.0
        %1326 = vmatprep.subr.mxu0 0.0
        %1327 = vmatpush1.msra.mxu0 0.0
        %1328 = vmatprep.subr.mxu0 0.0
        %1329 = vmatpush1.msra.mxu0 0.0
        %1330 = vmatprep.subr.mxu0 0.0
        %1331 = vmatpush1.msra.mxu0 0.0
        %1332 = vmatprep.subr.mxu0 0.0
        %1333 = vmatpush1.msra.mxu0 0.0
        %1334 = vmatprep.subr.mxu0 0.0
        %1335 = vmatpush1.msra.mxu0 0.0
        %1336 = vmatprep.subr.mxu0 0.0
        %1337 = vmatpush1.msra.mxu0 0.0
        %1338 = vmatprep.subr.mxu0 0.0
        %1339 = vmatpush1.msra.mxu0 0.0
        %1340 = vmatprep.subr.mxu0 0.0
        %1341 = vmatpush1.msra.mxu0 0.0
        %1342 = vmatprep.subr.mxu0 0.0
        %1343 = vmatpush1.msra.mxu0 0.0
        %1344 = vmatprep.subr.mxu0 0.0
        %1345 = vmatpush1.msra.mxu0 0.0
        %1346 = vmatprep.subr.mxu0 0.0
        %1347 = vmatpush1.msra.mxu0 0.0
        %1348 = vmatprep.subr.mxu0 0.0
        %1349 = vmatpush1.msra.mxu0 0.0
        %1350 = vmatprep.subr.mxu0 0.0
        %1351 = vmatpush1.msra.mxu0 0.0
        %1352 = vmatprep.subr.mxu0 0.0
        %1353 = vmatpush1.msra.mxu0 0.0
        %1354 = vmatprep.subr.mxu0 0.0
        %1355 = vmatpush1.msra.mxu0 0.0
        %1356 = vmatprep.subr.mxu0 0.0
        %1357 = vmatpush1.msra.mxu0 0.0
        %1358 = vmatprep.subr.mxu0 0.0
        %1359 = vmatpush1.msra.mxu0 0.0
        %1360 = vmatprep.subr.mxu0 0.0
        %1361 = vmatpush1.msra.mxu0 0.0
        %1362 = vmatprep.subr.mxu0 0.0
        %1363 = vmatpush1.msra.mxu0 0.0
        %1364 = vmatprep.subr.mxu0 0.0
        %1365 = vmatpush1.msra.mxu0 0.0
        %1366 = vmatprep.subr.mxu0 0.0
        %1367 = vmatpush1.msra.mxu0 0.0
        %1368 = vmatprep.subr.mxu0 0.0
        %1369 = vmatpush1.msra.mxu0 0.0
        %1370 = vmatprep.subr.mxu0 0.0
        %1371 = vmatpush1.msra.mxu0 0.0
        %1372 = vmatprep.subr.mxu0 0.0
        %1373 = vmatpush1.msra.mxu0 0.0
        %1374 = vmatprep.subr.mxu0 0.0
        %1375 = vmatpush1.msra.mxu0 0.0
        %1376 = vmatprep.subr.mxu0 0.0
        %1377 = vmatpush1.msra.mxu0 0.0
        %1378 = vmatprep.mubr.f32.mxu0 0.0
        %1379 = vmatmul.mubr.f32.gmra.mrb[0].mxu0 %v1312
        %v1380 = vpop.f32.mrb[0].mxu0
        %v1381 = vadd.f32 0.0, %v1380
        %v1382 = vpop.f32.mrb[0].mxu0
        %1383 = vdwg.mxu0
        %1385 = vrot.lane.b32.xlu0 %v1051, 32
        %v1386 = vpop.permute.xlu0 %1385
        %1389 = vrot.lane.b32.xlu0 %v1216, 64
        %v1390 = vpop.permute.xlu0 %1389
        %1393 = vrot.lane.b32.xlu0 %v1381, 96
        %v1394 = vpop.permute.xlu0 %1393
        %v1396 = vsel %vm372, %v885, %v1386
        %vm1397 = vcmask 523264
        %v1398 = vsel %vm1397, %v1396, %v1390
        %vm1399 = vcmask 785408
        %v1400 = vsel %vm1399, %v1398, %v1394
        %v1401 = vld [vmem:[%s9] sm:$0xff]
        %v1402 = vld [vmem:[%s9 + $0x8] sm:$0xff]
        %v1403 = vld [vmem:[%s9 + $0x10] sm:$0xff]
        %v1404 = vld [vmem:[%s9 + $0x18] sm:$0xff]
        %v1405 = vld [vmem:[%s9 + $0x20] sm:$0xff]
        %v1406 = vld [vmem:[%s9 + $0x28] sm:$0xff]
        %v1407 = vld [vmem:[%s9 + $0x30] sm:$0xff]
        %v1408 = vld [vmem:[%s9 + $0x38] sm:$0xff]
        %v1409 = vld [vmem:[%s9 + $0x40] sm:$0xff]
        %v1410 = vld [vmem:[%s9 + $0x48] sm:$0xff]
        %v1411 = vld [vmem:[%s9 + $0x50] sm:$0xff]
        %v1412 = vld [vmem:[%s9 + $0x58] sm:$0xff]
        %v1413 = vld [vmem:[%s9 + $0x60] sm:$0xff]
        %v1414 = vld [vmem:[%s9 + $0x68] sm:$0xff]
        %v1415 = vld [vmem:[%s9 + $0x70] sm:$0xff]
        %v1416 = vld [vmem:[%s9 + $0x78] sm:$0xff]
        %1417 = vmatprep.subr.mxu0 0.0
        %1418 = vmatpush1.msra.mxu0 %v1401
        %1419 = vmatprep.subr.mxu0 0.0
        %1420 = vmatpush1.msra.mxu0 %v1402
        %1421 = vmatprep.subr.mxu0 0.0
        %1422 = vmatpush1.msra.mxu0 %v1403
        %1423 = vmatprep.subr.mxu0 0.0
        %1424 = vmatpush1.msra.mxu0 %v1404
        %1425 = vmatprep.subr.mxu0 0.0
        %1426 = vmatpush1.msra.mxu0 %v1405
        %1427 = vmatprep.subr.mxu0 0.0
        %1428 = vmatpush1.msra.mxu0 %v1406
        %1429 = vmatprep.subr.mxu0 0.0
        %1430 = vmatpush1.msra.mxu0 %v1407
        %1431 = vmatprep.subr.mxu0 0.0
        %1432 = vmatpush1.msra.mxu0 %v1408
        %1433 = vmatprep.subr.mxu0 0.0
        %1434 = vmatpush1.msra.mxu0 %v1409
        %1435 = vmatprep.subr.mxu0 0.0
        %1436 = vmatpush1.msra.mxu0 %v1410
        %1437 = vmatprep.subr.mxu0 0.0
        %1438 = vmatpush1.msra.mxu0 %v1411
        %1439 = vmatprep.subr.mxu0 0.0
        %1440 = vmatpush1.msra.mxu0 %v1412
        %1441 = vmatprep.subr.mxu0 0.0
        %1442 = vmatpush1.msra.mxu0 %v1413
        %1443 = vmatprep.subr.mxu0 0.0
        %1444 = vmatpush1.msra.mxu0 %v1414
        %1445 = vmatprep.subr.mxu0 0.0
        %1446 = vmatpush1.msra.mxu0 %v1415
        %1447 = vmatprep.subr.mxu0 0.0
        %1448 = vmatpush1.msra.mxu0 %v1416
        %1449 = vmatprep.subr.mxu0 0.0
        %1450 = vmatpush1.msra.mxu0 0.0
        %1451 = vmatprep.subr.mxu0 0.0
        %1452 = vmatpush1.msra.mxu0 0.0
        %1453 = vmatprep.subr.mxu0 0.0
        %1454 = vmatpush1.msra.mxu0 0.0
        %1455 = vmatprep.subr.mxu0 0.0
        %1456 = vmatpush1.msra.mxu0 0.0
        %1457 = vmatprep.subr.mxu0 0.0
        %1458 = vmatpush1.msra.mxu0 0.0
        %1459 = vmatprep.subr.mxu0 0.0
        %1460 = vmatpush1.msra.mxu0 0.0
        %1461 = vmatprep.subr.mxu0 0.0
        %1462 = vmatpush1.msra.mxu0 0.0
        %1463 = vmatprep.subr.mxu0 0.0
        %1464 = vmatpush1.msra.mxu0 0.0
        %1465 = vmatprep.subr.mxu0 0.0
        %1466 = vmatpush1.msra.mxu0 0.0
        %1467 = vmatprep.subr.mxu0 0.0
        %1468 = vmatpush1.msra.mxu0 0.0
        %1469 = vmatprep.subr.mxu0 0.0
        %1470 = vmatpush1.msra.mxu0 0.0
        %1471 = vmatprep.subr.mxu0 0.0
        %1472 = vmatpush1.msra.mxu0 0.0
        %1473 = vmatprep.subr.mxu0 0.0
        %1474 = vmatpush1.msra.mxu0 0.0
        %1475 = vmatprep.subr.mxu0 0.0
        %1476 = vmatpush1.msra.mxu0 0.0
        %1477 = vmatprep.subr.mxu0 0.0
        %1478 = vmatpush1.msra.mxu0 0.0
        %1479 = vmatprep.subr.mxu0 0.0
        %1480 = vmatpush1.msra.mxu0 0.0
        %1481 = vmatprep.mubr.f32.mxu0 0.0
        %1482 = vmatmul.mubr.f32.gmra.mrb[0].mxu0 %v1400
        %v1483 = vpop.f32.mrb[0].mxu0
        %v1484 = vadd.f32 0.0, %v1483
        %v1485 = vpop.f32.mrb[0].mxu0
        %1486 = vdwg.mxu0
        %1487 = vst.msk [vmem:[%s361] sm:$0xff] %vm372, %v1484
        %s1488 = sand.u32 %s252, 1
        %s1489 = scalar_lea.sflag [#allocation3], %s1488
        %s1490 = sand.u32 %s252, 1
        %s1491 = smul.addr %s1490, 8
        %s1492 = scalar_lea.vmem [#allocation2], %s1491
        // Predicated region
        $region61: #{tpu_custom_call.1} parent=59 // pred_check
          %p1493 = pneg %p262
        $region62: #{tpu_custom_call.1} parent=59 // pred_check_branch
          %1495 = sbr.rel (%p1493) target = $region64
        $region63: #{tpu_custom_call.1} parent=59 // pred_region
          %s1497 = ssub.s32 128, 128
          %1498 = vsyncadd %s1489, %s1497
          %s1499 = smul.addr %s24, 128
          %s1500 = scalar_lea.hbm %s10, %s1499
          %s1502 = sshll.u32 %s1492, 4
          %s1503 = int_to_ptr.vmem [resolvable:$true] %s1502
          %1505 = dma.vmem_to_hbm [thread:$0]  %s1503, 128, %s1500, %s1489
        $region64: #{tpu_custom_call.1} parent=59 // pred_fallthru
          _
      $region60: #{tpu_custom_call.1} parent=5 // pred_fallthru
        _
      %p1506 = scmp.le.s32.totalorder 2, %s19
      // Predicated region
      $region65: #{tpu_custom_call.1} parent=5 // pred_check
        %p1507 = pneg %p1506
      $region66: #{tpu_custom_call.1} parent=5 // pred_check_branch
        %1509 = sbr.rel (%p1507) target = $region68
      $region67: #{tpu_custom_call.1} parent=5 // pred_region
        %s1510 = ssub.s32 %s19, 2
        // Predicated region
        $region69: #{tpu_custom_call.1} parent=67 // pred_check
          %p1511 = pneg %p268
        $region70: #{tpu_custom_call.1} parent=67 // pred_check_branch
          %1513 = sbr.rel (%p1511) target = $region72
        $region71: #{tpu_custom_call.1} parent=67 // pred_region
          %s1514 = sand.u32 %s253, 1
          %s1515 = scalar_lea.sflag [#allocation3], %s1514
          %s1516 = sand.u32 %s253, 1
          %s1517 = smul.addr %s1516, 8
          %s1518 = scalar_lea.vmem [#allocation2], %s1517
          %1519 = dma.done %s1515, 128
        $region72: #{tpu_custom_call.1} parent=67 // pred_fallthru
          _
      $region68: #{tpu_custom_call.1} parent=5 // pred_fallthru
        _
    $region6: #{tpu_custom_call.1} parent=1 // loop_footer
      %s23 = sadd.s32 1, %s19
    $region7: #{tpu_custom_call.1} parent=1 // loop_footer_branch
      %18 = sbr.rel target = $region3
    $region8: #{tpu_custom_call.1} parent=1 // loop_exit
      _
    %1520 = vsyncpa [#allocation3], 1
    %s1521 = scalar_lea.sflag [#allocation3], 1
    %1522 = vsyncpa %s1521, 1

</llo_original>
